<compile_context>
chip_gen: v6e
topology: v6e:2x2x1
jax: 0.10.0
libtpu: 0.0.40
codegen_flags: <defaults>
</compile_context>

<pallas_src>
import functools

import jax
import jax.numpy as jnp
from jax.experimental import pallas as pl
from jax.experimental.pallas import tpu as pltpu


def _conv_kernel(x_ref, w_ref, b_ref, o_ref, *,
                 batch_blk, kh_sz, kw_sz, w_img, c_out, hw):
    # x_ref: (B, Cin, H*W)       lane-dense flattened images
    # w_ref: (KH*KW, Cout, Cin)  per-tap weight slabs, tap t = kh*KW + kw
    # b_ref: (Cout, 1)
    # o_ref: (B, Cout, H*W)      full (uncropped) output map, lane-dense
    bias = jnp.broadcast_to(b_ref[...].astype(jnp.float32), (c_out, hw))
    for bi in range(batch_blk):
        x = x_ref[bi]                                  # (Cin, H*W)
        acc = bias                                     # bias folded into init
        for kh in range(kh_sz):
            for kw in range(kw_sz):
                s = kh * w_img + kw
                # tap[ci, p] = x[ci, (p + s) % HW]  (np.roll semantics, so roll
                # by HW - s).  Wrapped-around columns land outside the valid
                # (Hout, Wout) window and are cropped by the wrapper.
                tap = x if s == 0 else pltpu.roll(x, shift=hw - s, axis=1)
                acc = acc + jnp.dot(w_ref[kh * kw_sz + kw], tap,
                                    preferred_element_type=jnp.float32)
        o_ref[bi] = acc.astype(o_ref.dtype)


def conv2d_tudui(x_nchw, w_oihw, bias):
    """Forward pass of Tudui: Conv2d(3, 64, kernel_size=3), NCHW in / NCHW out."""
    n, c_in, h, w = x_nchw.shape
    c_out, c_in_w, kh, kw = w_oihw.shape
    assert c_in == c_in_w
    h_out, w_out = h - kh + 1, w - kw + 1
    hw = h * w

    # Lane-dense activations: contiguous (free) reshape to (N, Cin, H*W).
    x_flat = x_nchw.reshape(n, c_in, hw)

    # Tiny one-time parameter relayouts (no activation transposes):
    # (Cout, Cin, KH, KW) -> (KH*KW, Cout, Cin) so w_taps[t] == W[:, :, kh, kw].
    w_taps = jnp.transpose(w_oihw, (2, 3, 0, 1)).reshape(kh * kw, c_out, c_in)
    b2 = bias.reshape(c_out, 1)

    # Images per grid step: amortize per-step overhead, but keep >= 2 steps so
    # v7x's two TensorCores both get work (neutral on single-TC v5e/v6e).
    if n <= 2:
        b_blk = 1
    else:
        b_blk = max(1, min(n // 2, 8))
        while n % b_blk:
            b_blk -= 1
    grid = n // b_blk

    kernel = functools.partial(
        _conv_kernel, batch_blk=b_blk, kh_sz=kh, kw_sz=kw,
        w_img=w, c_out=c_out, hw=hw)

    out_full = pl.pallas_call(
        kernel,
        out_shape=jax.ShapeDtypeStruct((n, c_out, hw), x_nchw.dtype),
        grid=(grid,),
        in_specs=[
            pl.BlockSpec((b_blk, c_in, hw), lambda i: (i, 0, 0)),
            pl.BlockSpec((kh * kw, c_out, c_in), lambda i: (0, 0, 0)),
            pl.BlockSpec((c_out, 1), lambda i: (0, 0)),
        ],
        out_specs=pl.BlockSpec((b_blk, c_out, hw), lambda i: (i, 0, 0)),
        compiler_params=pltpu.CompilerParams(
            dimension_semantics=("parallel",)),
    )(x_flat, w_taps, b2)

    # Crop the full (H, W) map down to the valid (Hout, Wout) window -> NCHW.
    return out_full.reshape(n, c_out, h, w)[:, :, :h_out, :w_out]


if __name__ == "__main__":
    key = jax.random.PRNGKey(0)
    k_x, k_w, k_b = jax.random.split(key, 3)

    # Small shapes consistent with the module: Conv2d requires 3 input channels.
    N, C_IN, H, W = 2, 3, 16, 16
    C_OUT, KH, KW = 64, 3, 3

    x = jax.random.normal(k_x, (N, C_IN, H, W), dtype=jnp.float32)

    # Deterministic synthetic parameters (PyTorch-style uniform(-1/sqrt(fan_in), ..)).
    fan_in = C_IN * KH * KW
    bound = 1.0 / jnp.sqrt(jnp.float32(fan_in))
    w_oihw = jax.random.uniform(k_w, (C_OUT, C_IN, KH, KW),
                                dtype=jnp.float32, minval=-bound, maxval=bound)
    bias = jax.random.uniform(k_b, (C_OUT,),
                              dtype=jnp.float32, minval=-bound, maxval=bound)

    y = conv2d_tudui(x, w_oihw, bias)
    jax.block_until_ready(y)

    # Sanity check against XLA's conv (same NCHW/OIHW semantics as PyTorch).
    y_ref = jax.lax.conv_general_dilated(
        x, w_oihw, window_strides=(1, 1), padding="VALID",
        dimension_numbers=("NCHW", "OIHW", "NCHW")) + bias.reshape(1, C_OUT, 1, 1)

    assert y.shape == (N, C_OUT, H - KH + 1, W - KW + 1)
    assert jnp.allclose(y, y_ref, atol=1e-4, rtol=1e-4)
    print("KERNEL_OK")
</pallas_src>

<mosaic_0001>
module attributes {stable_mosaic.version = 11 : i64} {
  func.func @_conv_kernel(%arg0: i32, %arg1: memref<1x3x256xf32, #tpu.memory_space<vmem>>, %arg2: memref<9x64x3xf32, #tpu.memory_space<vmem>>, %arg3: memref<64x1xf32, #tpu.memory_space<vmem>>, %arg4: memref<1x64x256xf32, #tpu.memory_space<vmem>>) attributes {dimension_semantics = [#tpu.dimension_semantics<parallel>], iteration_bounds = array<i64: 2>, scalar_prefetch = 0 : i64, scratch_operands = 0 : i64, tpu.core_type = #tpu.core_type<tc>, window_params = [{transform_indices = @transform_0, window_bounds = array<i64: 1, 3, 256>}, {pipeline_mode = #tpu.pipeline_mode<synchronous>, transform_indices = @transform_1, window_bounds = array<i64: 9, 64, 3>}, {pipeline_mode = #tpu.pipeline_mode<synchronous>, transform_indices = @transform_2, window_bounds = array<i64: 64, 1>}, {transform_indices = @transform_3, window_bounds = array<i64: 1, 64, 256>}]} {
    %c0 = arith.constant 0 : index
    %c0_0 = arith.constant 0 : index
    %0 = vector.load %arg3[%c0, %c0_0] : memref<64x1xf32, #tpu.memory_space<vmem>>, vector<64x1xf32>
    %1 = vector.shape_cast %0 : vector<64x1xf32> to vector<64x1xf32>
    %2 = vector.broadcast %1 : vector<64x1xf32> to vector<64x256xf32>
    %c0_1 = arith.constant 0 : index
    %c0_2 = arith.constant 0 : index
    %c0_3 = arith.constant 0 : index
    %3 = vector.load %arg1[%c0_1, %c0_2, %c0_3] : memref<1x3x256xf32, #tpu.memory_space<vmem>>, vector<1x3x256xf32>
    %4 = vector.shape_cast %3 : vector<1x3x256xf32> to vector<3x256xf32>
    %c0_4 = arith.constant 0 : index
    %c0_5 = arith.constant 0 : index
    %c0_6 = arith.constant 0 : index
    %5 = vector.load %arg2[%c0_4, %c0_5, %c0_6] : memref<9x64x3xf32, #tpu.memory_space<vmem>>, vector<1x64x3xf32>
    %6 = vector.shape_cast %5 : vector<1x64x3xf32> to vector<64x3xf32>
    %cst = arith.constant dense<0.000000e+00> : vector<64x256xf32>
    %7 = tpu.matmul %6, %4, %cst {dimension_numbers = #tpu.dot_dimension_numbers<[1], [0], [0], [1], [0, 0, 1, 1], [], []>} : vector<64x3xf32>, vector<3x256xf32>, vector<64x256xf32> -> vector<64x256xf32>
    %8 = arith.addf %2, %7 : vector<64x256xf32>
    %c255_i32 = arith.constant 255 : i32
    %9 = tpu.dynamic_rotate %4 by %c255_i32 dim 1 : vector<3x256xf32>, i32 -> vector<3x256xf32>
    %c1 = arith.constant 1 : index
    %c0_7 = arith.constant 0 : index
    %c0_8 = arith.constant 0 : index
    %10 = vector.load %arg2[%c1, %c0_7, %c0_8] : memref<9x64x3xf32, #tpu.memory_space<vmem>>, vector<1x64x3xf32>
    %11 = vector.shape_cast %10 : vector<1x64x3xf32> to vector<64x3xf32>
    %cst_9 = arith.constant dense<0.000000e+00> : vector<64x256xf32>
    %12 = tpu.matmul %11, %9, %cst_9 {dimension_numbers = #tpu.dot_dimension_numbers<[1], [0], [0], [1], [0, 0, 1, 1], [], []>} : vector<64x3xf32>, vector<3x256xf32>, vector<64x256xf32> -> vector<64x256xf32>
    %13 = arith.addf %8, %12 : vector<64x256xf32>
    %c254_i32 = arith.constant 254 : i32
    %14 = tpu.dynamic_rotate %4 by %c254_i32 dim 1 : vector<3x256xf32>, i32 -> vector<3x256xf32>
    %c2 = arith.constant 2 : index
    %c0_10 = arith.constant 0 : index
    %c0_11 = arith.constant 0 : index
    %15 = vector.load %arg2[%c2, %c0_10, %c0_11] : memref<9x64x3xf32, #tpu.memory_space<vmem>>, vector<1x64x3xf32>
    %16 = vector.shape_cast %15 : vector<1x64x3xf32> to vector<64x3xf32>
    %cst_12 = arith.constant dense<0.000000e+00> : vector<64x256xf32>
    %17 = tpu.matmul %16, %14, %cst_12 {dimension_numbers = #tpu.dot_dimension_numbers<[1], [0], [0], [1], [0, 0, 1, 1], [], []>} : vector<64x3xf32>, vector<3x256xf32>, vector<64x256xf32> -> vector<64x256xf32>
    %18 = arith.addf %13, %17 : vector<64x256xf32>
    %c240_i32 = arith.constant 240 : i32
    %19 = tpu.dynamic_rotate %4 by %c240_i32 dim 1 : vector<3x256xf32>, i32 -> vector<3x256xf32>
    %c3 = arith.constant 3 : index
    %c0_13 = arith.constant 0 : index
    %c0_14 = arith.constant 0 : index
    %20 = vector.load %arg2[%c3, %c0_13, %c0_14] : memref<9x64x3xf32, #tpu.memory_space<vmem>>, vector<1x64x3xf32>
    %21 = vector.shape_cast %20 : vector<1x64x3xf32> to vector<64x3xf32>
    %cst_15 = arith.constant dense<0.000000e+00> : vector<64x256xf32>
    %22 = tpu.matmul %21, %19, %cst_15 {dimension_numbers = #tpu.dot_dimension_numbers<[1], [0], [0], [1], [0, 0, 1, 1], [], []>} : vector<64x3xf32>, vector<3x256xf32>, vector<64x256xf32> -> vector<64x256xf32>
    %23 = arith.addf %18, %22 : vector<64x256xf32>
    %c239_i32 = arith.constant 239 : i32
    %24 = tpu.dynamic_rotate %4 by %c239_i32 dim 1 : vector<3x256xf32>, i32 -> vector<3x256xf32>
    %c4 = arith.constant 4 : index
    %c0_16 = arith.constant 0 : index
    %c0_17 = arith.constant 0 : index
    %25 = vector.load %arg2[%c4, %c0_16, %c0_17] : memref<9x64x3xf32, #tpu.memory_space<vmem>>, vector<1x64x3xf32>
    %26 = vector.shape_cast %25 : vector<1x64x3xf32> to vector<64x3xf32>
    %cst_18 = arith.constant dense<0.000000e+00> : vector<64x256xf32>
    %27 = tpu.matmul %26, %24, %cst_18 {dimension_numbers = #tpu.dot_dimension_numbers<[1], [0], [0], [1], [0, 0, 1, 1], [], []>} : vector<64x3xf32>, vector<3x256xf32>, vector<64x256xf32> -> vector<64x256xf32>
    %28 = arith.addf %23, %27 : vector<64x256xf32>
    %c238_i32 = arith.constant 238 : i32
    %29 = tpu.dynamic_rotate %4 by %c238_i32 dim 1 : vector<3x256xf32>, i32 -> vector<3x256xf32>
    %c5 = arith.constant 5 : index
    %c0_19 = arith.constant 0 : index
    %c0_20 = arith.constant 0 : index
    %30 = vector.load %arg2[%c5, %c0_19, %c0_20] : memref<9x64x3xf32, #tpu.memory_space<vmem>>, vector<1x64x3xf32>
    %31 = vector.shape_cast %30 : vector<1x64x3xf32> to vector<64x3xf32>
    %cst_21 = arith.constant dense<0.000000e+00> : vector<64x256xf32>
    %32 = tpu.matmul %31, %29, %cst_21 {dimension_numbers = #tpu.dot_dimension_numbers<[1], [0], [0], [1], [0, 0, 1, 1], [], []>} : vector<64x3xf32>, vector<3x256xf32>, vector<64x256xf32> -> vector<64x256xf32>
    %33 = arith.addf %28, %32 : vector<64x256xf32>
    %c224_i32 = arith.constant 224 : i32
    %34 = tpu.dynamic_rotate %4 by %c224_i32 dim 1 : vector<3x256xf32>, i32 -> vector<3x256xf32>
    %c6 = arith.constant 6 : index
    %c0_22 = arith.constant 0 : index
    %c0_23 = arith.constant 0 : index
    %35 = vector.load %arg2[%c6, %c0_22, %c0_23] : memref<9x64x3xf32, #tpu.memory_space<vmem>>, vector<1x64x3xf32>
    %36 = vector.shape_cast %35 : vector<1x64x3xf32> to vector<64x3xf32>
    %cst_24 = arith.constant dense<0.000000e+00> : vector<64x256xf32>
    %37 = tpu.matmul %36, %34, %cst_24 {dimension_numbers = #tpu.dot_dimension_numbers<[1], [0], [0], [1], [0, 0, 1, 1], [], []>} : vector<64x3xf32>, vector<3x256xf32>, vector<64x256xf32> -> vector<64x256xf32>
    %38 = arith.addf %33, %37 : vector<64x256xf32>
    %c223_i32 = arith.constant 223 : i32
    %39 = tpu.dynamic_rotate %4 by %c223_i32 dim 1 : vector<3x256xf32>, i32 -> vector<3x256xf32>
    %c7 = arith.constant 7 : index
    %c0_25 = arith.constant 0 : index
    %c0_26 = arith.constant 0 : index
    %40 = vector.load %arg2[%c7, %c0_25, %c0_26] : memref<9x64x3xf32, #tpu.memory_space<vmem>>, vector<1x64x3xf32>
    %41 = vector.shape_cast %40 : vector<1x64x3xf32> to vector<64x3xf32>
    %cst_27 = arith.constant dense<0.000000e+00> : vector<64x256xf32>
    %42 = tpu.matmul %41, %39, %cst_27 {dimension_numbers = #tpu.dot_dimension_numbers<[1], [0], [0], [1], [0, 0, 1, 1], [], []>} : vector<64x3xf32>, vector<3x256xf32>, vector<64x256xf32> -> vector<64x256xf32>
    %43 = arith.addf %38, %42 : vector<64x256xf32>
    %c222_i32 = arith.constant 222 : i32
    %44 = tpu.dynamic_rotate %4 by %c222_i32 dim 1 : vector<3x256xf32>, i32 -> vector<3x256xf32>
    %c8 = arith.constant 8 : index
    %c0_28 = arith.constant 0 : index
    %c0_29 = arith.constant 0 : index
    %45 = vector.load %arg2[%c8, %c0_28, %c0_29] : memref<9x64x3xf32, #tpu.memory_space<vmem>>, vector<1x64x3xf32>
    %46 = vector.shape_cast %45 : vector<1x64x3xf32> to vector<64x3xf32>
    %cst_30 = arith.constant dense<0.000000e+00> : vector<64x256xf32>
    %47 = tpu.matmul %46, %44, %cst_30 {dimension_numbers = #tpu.dot_dimension_numbers<[1], [0], [0], [1], [0, 0, 1, 1], [], []>} : vector<64x3xf32>, vector<3x256xf32>, vector<64x256xf32> -> vector<64x256xf32>
    %48 = arith.addf %43, %47 : vector<64x256xf32>
    %c0_31 = arith.constant 0 : index
    %c0_32 = arith.constant 0 : index
    %c0_33 = arith.constant 0 : index
    %49 = vector.load %arg4[%c0_31, %c0_32, %c0_33] : memref<1x64x256xf32, #tpu.memory_space<vmem>>, vector<1x64x256xf32>
    %50 = vector.shape_cast %49 : vector<1x64x256xf32> to vector<64x256xf32>
    %51 = vector.shape_cast %48 : vector<64x256xf32> to vector<1x64x256xf32>
    tpu.vector_store %arg4[%c0_31, %c0_32, %c0_33], %51 {strides = array<i32>} : memref<1x64x256xf32, #tpu.memory_space<vmem>>, vector<1x64x256xf32>,
    return
  }
  func.func @transform_0(%arg0: i32) -> (i32, i32, i32) {
    %c0_i32 = arith.constant 0 : i32
    %c0_i32_0 = arith.constant 0 : i32
    %c0_i32_1 = arith.constant 0 : i32
    return %arg0, %c0_i32, %c0_i32_0 : i32, i32, i32
  }
  func.func @transform_1(%arg0: i32) -> (i32, i32, i32) {
    %c0_i32 = arith.constant 0 : i32
    %c0_i32_0 = arith.constant 0 : i32
    %c0_i32_1 = arith.constant 0 : i32
    %c0_i32_2 = arith.constant 0 : i32
    return %c0_i32, %c0_i32_0, %c0_i32_1 : i32, i32, i32
  }
  func.func @transform_2(%arg0: i32) -> (i32, i32) {
    %c0_i32 = arith.constant 0 : i32
    %c0_i32_0 = arith.constant 0 : i32
    %c0_i32_1 = arith.constant 0 : i32
    return %c0_i32, %c0_i32_0 : i32, i32
  }
  func.func @transform_3(%arg0: i32) -> (i32, i32, i32) {
    %c0_i32 = arith.constant 0 : i32
    %c0_i32_0 = arith.constant 0 : i32
    %c0_i32_1 = arith.constant 0 : i32
    return %arg0, %c0_i32, %c0_i32_0 : i32, i32, i32
  }
}

</mosaic_0001>

<llo_original>
// kernel: tpu_custom_call.1
$region0: #{tpu_custom_call.1}
  #allocation0 [shape = 'u32[]', space=smem, size = 0x4, offset = 0x4, fixed_abs, tag = 'smem constant byte address 0x4 - core index']
  #allocation1 [shape = 'u32[144,128]{1,0:T(1,128)}', space=vmem, size = 0x12000, scoped, tag = 'internal scratch']
  %s0 = inlined_call_operand.vmem [shape: f32[2,3,256], index: 0, kind: input, shape index: {}]
  %s1 = inlined_call_operand.vmem [shape: f32[9,64,3], index: 1, kind: input, shape index: {}]
  %s2 = inlined_call_operand.vmem [shape: f32[64,1], index: 2, kind: input, shape index: {}]
  %s3 = inlined_call_operand.hbm [shape: f32[2,64,256], index: 3, kind: output, shape index: {}]
  %s4 = sld [smem:[#allocation0]]
  $region45: #{tpu_custom_call.1} parent=0
    _
  %s6 = ssub.s32 1, %s4
  %s7 = scalar_select 0, %s6, %s4
  $region1: #{tpu_custom_call.1} parent=0
    #allocation2 [shape = 'u8[131072]{0}', space=vmem, size = 0x20000, scoped, tag = 'output window, operand 0']
    #allocation3 [shape = 's32[2]{0}', space=sflag, size = 0x8, scoped, tag = 'scoped memory for tpu_custom_call.1']
    %8 = vsyncpa [#allocation3], 0
    %s9 = scalar_lea.sflag [#allocation3], 1
    %10 = vsyncpa %s9, 0
    loop: start=0, step=1, limit=4
    $region2: #{tpu_custom_call.1} parent=1 // loop_pre_header
      _
    $region3: #{tpu_custom_call.1} parent=1 // loop_header
      %s12 = sphi 0, %s16
      %p13 = scmp.ge.s32.totalorder %s12, 4
      %s22 = sphi 0, %s24
      %s25 = sphi 0, %s22
      %s26 = sphi 0, %s25
      %s42 = sphi 0, %s26
      %s46 = sphi 0, %s46
      %s48 = sphi 0, %s46
      %s49 = sphi 0, %s48
      %s63 = sphi 0, %s49
      %s67 = sphi 0, %s67
      %s69 = sphi 0, %s67
      %s70 = sphi 0, %s69
      %s84 = sphi 0, %s70
      %s90 = sphi 0, %s92
      %s93 = sphi 0, %s90
      %s94 = sphi 0, %s93
      %s110 = sphi 0, %s94
    $region4: #{tpu_custom_call.1} parent=1 // loop_header_branch
      %15 = sbr.rel (%p13) target = $region8
    $region5: #{tpu_custom_call.1} parent=1 // loop_body
      %s17 = ssub.s32 %s12, 1
      %s18 = ssub.s32 %s12, 2
      %s19 = sadd.s32 %s12, 1
      %s20 = ssub.s32 %s12, %s19
      %p21 = scmp.eq.s32.totalorder %s20, 0
      %s23 = sadd.s32 %s22, 1
      %s24 = scalar_select %p21, %s22, %s23
      %p27 = pneg %p21
      %p28 = scmp.eq.s32.totalorder %s12, 1
      %p29 = por %p27, %p28
      %p30 = scmp.ne.s32.totalorder %s22, %s25
      %p31 = scmp.eq.s32.totalorder %s12, 0
      %p32 = por %p30, %p31
      %p33 = scmp.ne.s32.totalorder %s22, %s25
      %p34 = scmp.eq.s32.totalorder %s17, 1
      %p35 = por %p33, %p34
      %p36 = scmp.ne.s32.totalorder %s25, %s26
      %p37 = scmp.eq.s32.totalorder %s17, 0
      %p38 = por %p36, %p37
      %p39 = scmp.ne.s32.totalorder %s25, %s26
      %p40 = scmp.eq.s32.totalorder %s18, 1
      %p41 = por %p39, %p40
      %p43 = scmp.ne.s32.totalorder %s26, %s42
      %p44 = scmp.eq.s32.totalorder %s18, 0
      %p45 = por %p43, %p44
      %s47 = sadd.s32 %s46, 1
      %p50 = scmp.eq.s32.totalorder %s12, 1
      %p51 = scmp.ne.s32.totalorder %s46, %s48
      %p52 = scmp.eq.s32.totalorder %s12, 0
      %p53 = por %p51, %p52
      %p54 = scmp.ne.s32.totalorder %s46, %s48
      %p55 = scmp.eq.s32.totalorder %s17, 1
      %p56 = por %p54, %p55
      %p57 = scmp.ne.s32.totalorder %s48, %s49
      %p58 = scmp.eq.s32.totalorder %s17, 0
      %p59 = por %p57, %p58
      %p60 = scmp.ne.s32.totalorder %s48, %s49
      %p61 = scmp.eq.s32.totalorder %s18, 1
      %p62 = por %p60, %p61
      %p64 = scmp.ne.s32.totalorder %s49, %s63
      %p65 = scmp.eq.s32.totalorder %s18, 0
      %p66 = por %p64, %p65
      %s68 = sadd.s32 %s67, 1
      %p71 = scmp.eq.s32.totalorder %s12, 1
      %p72 = scmp.ne.s32.totalorder %s67, %s69
      %p73 = scmp.eq.s32.totalorder %s12, 0
      %p74 = por %p72, %p73
      %p75 = scmp.ne.s32.totalorder %s67, %s69
      %p76 = scmp.eq.s32.totalorder %s17, 1
      %p77 = por %p75, %p76
      %p78 = scmp.ne.s32.totalorder %s69, %s70
      %p79 = scmp.eq.s32.totalorder %s17, 0
      %p80 = por %p78, %p79
      %p81 = scmp.ne.s32.totalorder %s69, %s70
      %p82 = scmp.eq.s32.totalorder %s18, 1
      %p83 = por %p81, %p82
      %p85 = scmp.ne.s32.totalorder %s70, %s84
      %p86 = scmp.eq.s32.totalorder %s18, 0
      %p87 = por %p85, %p86
      %s88 = ssub.s32 %s12, %s19
      %p89 = scmp.eq.s32.totalorder %s88, 0
      %s91 = sadd.s32 %s90, 1
      %s92 = scalar_select %p89, %s90, %s91
      %p95 = pneg %p89
      %p96 = scmp.eq.s32.totalorder %s12, 1
      %p97 = por %p95, %p96
      %p98 = scmp.ne.s32.totalorder %s90, %s93
      %p99 = scmp.eq.s32.totalorder %s12, 0
      %p100 = por %p98, %p99
      %p101 = scmp.ne.s32.totalorder %s90, %s93
      %p102 = scmp.eq.s32.totalorder %s17, 1
      %p103 = por %p101, %p102
      %p104 = scmp.ne.s32.totalorder %s93, %s94
      %p105 = scmp.eq.s32.totalorder %s17, 0
      %p106 = por %p104, %p105
      %p107 = scmp.ne.s32.totalorder %s93, %s94
      %p108 = scmp.eq.s32.totalorder %s18, 1
      %p109 = por %p107, %p108
      %p111 = scmp.ne.s32.totalorder %s94, %s110
      %p112 = scmp.eq.s32.totalorder %s18, 0
      %p113 = por %p111, %p112
      %p114 = scmp.le.s32.totalorder 1, %s12
      %p115 = scmp.lt.s32.totalorder %s12, 3
      %p116 = pnand %p114, %p115
      %p117 = pneg %p116
      // Predicated region
      $region9: #{tpu_custom_call.1} parent=5 // pred_check
        _
      $region10: #{tpu_custom_call.1} parent=5 // pred_check_branch
        %119 = sbr.rel (%p116) target = $region12
      $region11: #{tpu_custom_call.1} parent=5 // pred_region
        %s120 = ssub.s32 %s12, 1
        // Predicated region
        $region13: #{tpu_custom_call.1} parent=11 // pred_check
          %p121 = pneg %p59
        $region14: #{tpu_custom_call.1} parent=11 // pred_check_branch
          %123 = sbr.rel (%p121) target = $region16
        $region15: #{tpu_custom_call.1} parent=11 // pred_region
          _
        $region16: #{tpu_custom_call.1} parent=11 // pred_fallthru
          _
        // Predicated region
        $region17: #{tpu_custom_call.1} parent=11 // pred_check
          %p124 = pneg %p80
        $region18: #{tpu_custom_call.1} parent=11 // pred_check_branch
          %126 = sbr.rel (%p124) target = $region20
        $region19: #{tpu_custom_call.1} parent=11 // pred_region
          _
        $region20: #{tpu_custom_call.1} parent=11 // pred_fallthru
          _
      $region12: #{tpu_custom_call.1} parent=5 // pred_fallthru
        _
      %p127 = scmp.lt.s32.totalorder %s12, 2
      // Predicated region
      $region21: #{tpu_custom_call.1} parent=5 // pred_check
        %p128 = pneg %p127
      $region22: #{tpu_custom_call.1} parent=5 // pred_check_branch
        %130 = sbr.rel (%p128) target = $region24
      $region23: #{tpu_custom_call.1} parent=5 // pred_region
        // Predicated region
        $region25: #{tpu_custom_call.1} parent=23 // pred_check
          %p131 = pneg %p32
        $region26: #{tpu_custom_call.1} parent=23 // pred_check_branch
          %133 = sbr.rel (%p131) target = $region28
        $region27: #{tpu_custom_call.1} parent=23 // pred_region
          %p134 = scmp.lt.s32.totalorder %s12, 1
          %s135 = scalar_select %p134, %s12, 1
          %s136 = smul.addr %s135, 2
          %s137 = smul.addr %s136, 4
          %s138 = scalar_lea.vmem %s0, %s137
        $region28: #{tpu_custom_call.1} parent=23 // pred_fallthru
          _
      $region24: #{tpu_custom_call.1} parent=5 // pred_fallthru
        _
      %p139 = scmp.le.s32.totalorder 1, %s12
      %p140 = scmp.lt.s32.totalorder %s12, 3
      %p141 = pnand %p139, %p140
      %p142 = pneg %p141
      // Predicated region
      $region29: #{tpu_custom_call.1} parent=5 // pred_check
        _
      $region30: #{tpu_custom_call.1} parent=5 // pred_check_branch
        %144 = sbr.rel (%p141) target = $region32
      $region31: #{tpu_custom_call.1} parent=5 // pred_region
        %s145 = ssub.s32 %s12, 1
        %p146 = scmp.lt.s32.totalorder %s17, 1
        %s147 = scalar_select %p146, %s17, 1
        %s148 = smul.addr %s147, 2
        %s149 = smul.addr %s148, 4
        %s150 = scalar_lea.vmem %s0, %s149
        %p151 = pneg %p38
        %p152 = pneg %p35
        %p153 = pneg %p59
        %p154 = pneg %p56
        %p155 = pneg %p80
        %p156 = pneg %p77
        %p157 = pneg %p106
        %p158 = pneg %p103
        %s159 = sand.u32 %s93, 1
        %s160 = scalar_lea.sflag [#allocation3], %s159
        %s161 = sand.u32 %s93, 1
        %s162 = smul.addr %s161, 128
        %s163 = scalar_lea.vmem [#allocation2], %s162
        %p164 = scmp.lt.s32.totalorder %s17, 1
        %s165 = scalar_select %p164, %s17, 1
        %s166 = smul.addr %s165, 2
        %s167 = smul.addr %s166, 4
        %s168 = scalar_lea.vmem %s0, %s167
        %v169 = vld [vmem:[%s2] sm:$0xff]
        %v170 = vld [vmem:[%s2 + $0x8] sm:$0xff]
        %v171 = vld [vmem:[%s2 + $0x10] sm:$0xff]
        %v172 = vld [vmem:[%s2 + $0x18] sm:$0xff]
        %v173 = vld [vmem:[%s2 + $0x20] sm:$0xff]
        %v174 = vld [vmem:[%s2 + $0x28] sm:$0xff]
        %v175 = vld [vmem:[%s2 + $0x30] sm:$0xff]
        %v176 = vld [vmem:[%s2 + $0x38] sm:$0xff]
        %178 = vset.pattern.permute.xlu0 0
        %179 = vperm.xlu0 %178, %v169
        %v180 = vpop.permute.xlu0 %179
        %183 = vset.pattern.permute.xlu0 0
        %184 = vperm.xlu0 %183, %v170
        %v185 = vpop.permute.xlu0 %184
        %188 = vset.pattern.permute.xlu0 0
        %189 = vperm.xlu0 %188, %v171
        %v190 = vpop.permute.xlu0 %189
        %193 = vset.pattern.permute.xlu0 0
        %194 = vperm.xlu0 %193, %v172
        %v195 = vpop.permute.xlu0 %194
        %198 = vset.pattern.permute.xlu0 0
        %199 = vperm.xlu0 %198, %v173
        %v200 = vpop.permute.xlu0 %199
        %203 = vset.pattern.permute.xlu0 0
        %204 = vperm.xlu0 %203, %v174
        %v205 = vpop.permute.xlu0 %204
        %208 = vset.pattern.permute.xlu0 0
        %209 = vperm.xlu0 %208, %v175
        %v210 = vpop.permute.xlu0 %209
        %213 = vset.pattern.permute.xlu0 0
        %214 = vperm.xlu0 %213, %v176
        %v215 = vpop.permute.xlu0 %214
        %v217 = vld [vmem:[%s168] sm:$0x77]
        %v218 = vld [vmem:[%s1] sm:$0xff]
        %v219 = vld [vmem:[%s1 + $0x8] sm:$0xff]
        %v220 = vld [vmem:[%s1 + $0x10] sm:$0xff]
        %v221 = vld [vmem:[%s1 + $0x18] sm:$0xff]
        %v222 = vld [vmem:[%s1 + $0x20] sm:$0xff]
        %v223 = vld [vmem:[%s1 + $0x28] sm:$0xff]
        %v224 = vld [vmem:[%s1 + $0x30] sm:$0xff]
        %v225 = vld [vmem:[%s1 + $0x38] sm:$0xff]
        %v227 = vcombine.high %v217, %v217
        %vm228 = vcmask 23552
        %v230 = vsel %vm228, %v218, 0
        %v233 = vsel %vm228, %v219, 0
        %v236 = vsel %vm228, %v220, 0
        %v239 = vsel %vm228, %v221, 0
        %v242 = vsel %vm228, %v222, 0
        %v245 = vsel %vm228, %v223, 0
        %v248 = vsel %vm228, %v224, 0
        %v251 = vsel %vm228, %v225, 0
        %vm253 = vcmask 1042432
        %v254 = vsel %vm253, %v217, 0
        %v256 = vsel %vm253, %v227, 0
        %258 = vmatprep.subr.mxu0 0.0
        %259 = vmatpush1.msra.mxu0 0.0
        %260 = vmatprep.subr.mxu0 0.0
        %261 = vmatpush1.msra.mxu0 0.0
        %262 = vmatprep.subr.mxu0 0.0
        %263 = vmatpush1.msra.mxu0 0.0
        %264 = vmatprep.subr.mxu0 0.0
        %265 = vmatpush1.msra.mxu0 0.0
        %266 = vmatprep.subr.mxu0 0.0
        %267 = vmatpush1.msra.mxu0 0.0
        %268 = vmatprep.subr.mxu0 0.0
        %269 = vmatpush1.msra.mxu0 0.0
        %270 = vmatprep.subr.mxu0 0.0
        %271 = vmatpush1.msra.mxu0 0.0
        %272 = vmatprep.subr.mxu0 0.0
        %273 = vmatpush1.msra.mxu0 0.0
        %274 = vmatprep.subr.mxu0 0.0
        %275 = vmatpush1.msra.mxu0 0.0
        %276 = vmatprep.subr.mxu0 0.0
        %277 = vmatpush1.msra.mxu0 0.0
        %278 = vmatprep.subr.mxu0 0.0
        %279 = vmatpush1.msra.mxu0 0.0
        %280 = vmatprep.subr.mxu0 0.0
        %281 = vmatpush1.msra.mxu0 0.0
        %282 = vmatprep.subr.mxu0 0.0
        %283 = vmatpush1.msra.mxu0 0.0
        %284 = vmatprep.subr.mxu0 0.0
        %285 = vmatpush1.msra.mxu0 0.0
        %286 = vmatprep.subr.mxu0 0.0
        %287 = vmatpush1.msra.mxu0 0.0
        %288 = vmatprep.subr.mxu0 %v256
        %289 = vmatpush1.msra.mxu0 %v254
        %290 = vmatprep.subr.mxu0 0.0
        %291 = vmatpush2.msra.mxu0 0.0
        %292 = vmatprep.subr.mxu0 0.0
        %293 = vmatpush2.msra.mxu0 0.0
        %294 = vmatprep.subr.mxu0 0.0
        %295 = vmatpush2.msra.mxu0 0.0
        %296 = vmatprep.subr.mxu0 0.0
        %297 = vmatpush2.msra.mxu0 0.0
        %298 = vmatprep.subr.mxu0 0.0
        %299 = vmatpush2.msra.mxu0 0.0
        %300 = vmatprep.subr.mxu0 0.0
        %301 = vmatpush2.msra.mxu0 0.0
        %302 = vmatprep.subr.mxu0 0.0
        %303 = vmatpush2.msra.mxu0 0.0
        %304 = vmatprep.subr.mxu0 0.0
        %305 = vmatpush2.msra.mxu0 0.0
        %306 = vmatprep.subr.mxu0 0.0
        %307 = vmatpush2.msra.mxu0 0.0
        %308 = vmatprep.subr.mxu0 0.0
        %309 = vmatpush2.msra.mxu0 0.0
        %310 = vmatprep.subr.mxu0 0.0
        %311 = vmatpush2.msra.mxu0 0.0
        %312 = vmatprep.subr.mxu0 0.0
        %313 = vmatpush2.msra.mxu0 0.0
        %314 = vmatprep.subr.mxu0 0.0
        %315 = vmatpush2.msra.mxu0 0.0
        %316 = vmatprep.subr.mxu0 0.0
        %317 = vmatpush2.msra.mxu0 0.0
        %318 = vmatprep.subr.mxu0 0.0
        %319 = vmatpush2.msra.mxu0 0.0
        %320 = vmatprep.subr.mxu0 0.0
        %321 = vmatpush2.msra.mxu0 0.0
        %322 = vmatprep.mubr.f32.mxu0 0.0
        %323 = vmatmul.mubr.f32.gmra.mxu0 %v230
        %v324 = vpop.f32.mrf.mxu0
        %v325 = vadd.f32 0.0, %v324
        %v326 = vpop.f32.mrf.mxu0
        %v327 = vadd.f32 0.0, %v326
        %328 = vmatprep.mubr.f32.mxu0 0.0
        %329 = vmatmul.mubr.f32.gmra.mxu0 %v233
        %v330 = vpop.f32.mrf.mxu0
        %v331 = vadd.f32 0.0, %v330
        %v332 = vpop.f32.mrf.mxu0
        %v333 = vadd.f32 0.0, %v332
        %334 = vmatprep.mubr.f32.mxu0 0.0
        %335 = vmatmul.mubr.f32.gmra.mxu0 %v236
        %v336 = vpop.f32.mrf.mxu0
        %v337 = vadd.f32 0.0, %v336
        %v338 = vpop.f32.mrf.mxu0
        %v339 = vadd.f32 0.0, %v338
        %340 = vmatprep.mubr.f32.mxu0 0.0
        %341 = vmatmul.mubr.f32.gmra.mxu0 %v239
        %v342 = vpop.f32.mrf.mxu0
        %v343 = vadd.f32 0.0, %v342
        %v344 = vpop.f32.mrf.mxu0
        %v345 = vadd.f32 0.0, %v344
        %346 = vmatprep.mubr.f32.mxu0 0.0
        %347 = vmatmul.mubr.f32.gmra.mxu0 %v242
        %v348 = vpop.f32.mrf.mxu0
        %v349 = vadd.f32 0.0, %v348
        %v350 = vpop.f32.mrf.mxu0
        %v351 = vadd.f32 0.0, %v350
        %352 = vmatprep.mubr.f32.mxu0 0.0
        %353 = vmatmul.mubr.f32.gmra.mxu0 %v245
        %v354 = vpop.f32.mrf.mxu0
        %v355 = vadd.f32 0.0, %v354
        %v356 = vpop.f32.mrf.mxu0
        %v357 = vadd.f32 0.0, %v356
        %358 = vmatprep.mubr.f32.mxu0 0.0
        %359 = vmatmul.mubr.f32.gmra.mxu0 %v248
        %v360 = vpop.f32.mrf.mxu0
        %v361 = vadd.f32 0.0, %v360
        %v362 = vpop.f32.mrf.mxu0
        %v363 = vadd.f32 0.0, %v362
        %364 = vmatprep.mubr.f32.mxu0 0.0
        %365 = vmatmul.mubr.f32.gmra.mxu0 %v251
        %v366 = vpop.f32.mrf.mxu0
        %v367 = vadd.f32 0.0, %v366
        %v368 = vpop.f32.mrf.mxu0
        %v369 = vadd.f32 0.0, %v368
        %370 = vdwg.mxu0
        %v371 = vadd.f32 %v180, %v325
        %v372 = vadd.f32 %v180, %v327
        %v373 = vadd.f32 %v185, %v331
        %v374 = vadd.f32 %v185, %v333
        %v375 = vadd.f32 %v190, %v337
        %v376 = vadd.f32 %v190, %v339
        %v377 = vadd.f32 %v195, %v343
        %v378 = vadd.f32 %v195, %v345
        %v379 = vadd.f32 %v200, %v349
        %v380 = vadd.f32 %v200, %v351
        %v381 = vadd.f32 %v205, %v355
        %v382 = vadd.f32 %v205, %v357
        %v383 = vadd.f32 %v210, %v361
        %v384 = vadd.f32 %v210, %v363
        %v385 = vadd.f32 %v215, %v367
        %v386 = vadd.f32 %v215, %v369
        %388 = vrot.lane.b32.xlu0 %v217, 127
        %v389 = vpop.permute.xlu0 %388
        %390 = vrot.lane.b32.xlu0 %v227, 127
        %v391 = vpop.permute.xlu0 %390
        %v392 = vlaneseq
        %v393 = vand.u32 %v392, 127
        %vm394 = vcmp.lt.s32.totalorder %v393, 127
        %v395 = vsel %vm394, %v389, %v391
        %v396 = vsel %vm394, %v391, %v389
        %s397 = scalar_lea.vmem %s1, 64
        %v398 = vld [vmem:[%s397] sm:$0xff]
        %v399 = vld [vmem:[%s397 + $0x8] sm:$0xff]
        %v400 = vld [vmem:[%s397 + $0x10] sm:$0xff]
        %v401 = vld [vmem:[%s397 + $0x18] sm:$0xff]
        %v402 = vld [vmem:[%s397 + $0x20] sm:$0xff]
        %v403 = vld [vmem:[%s397 + $0x28] sm:$0xff]
        %v404 = vld [vmem:[%s397 + $0x30] sm:$0xff]
        %v405 = vld [vmem:[%s397 + $0x38] sm:$0xff]
        %v407 = vsel %vm228, %v398, 0
        %v410 = vsel %vm228, %v399, 0
        %v413 = vsel %vm228, %v400, 0
        %v416 = vsel %vm228, %v401, 0
        %v419 = vsel %vm228, %v402, 0
        %v422 = vsel %vm228, %v403, 0
        %v425 = vsel %vm228, %v404, 0
        %v428 = vsel %vm228, %v405, 0
        %v431 = vsel %vm253, %v395, 0
        %v434 = vsel %vm253, %v396, 0
        %436 = vmatprep.subr.mxu0 0.0
        %437 = vmatpush1.msra.mxu0 0.0
        %438 = vmatprep.subr.mxu0 0.0
        %439 = vmatpush1.msra.mxu0 0.0
        %440 = vmatprep.subr.mxu0 0.0
        %441 = vmatpush1.msra.mxu0 0.0
        %442 = vmatprep.subr.mxu0 0.0
        %443 = vmatpush1.msra.mxu0 0.0
        %444 = vmatprep.subr.mxu0 0.0
        %445 = vmatpush1.msra.mxu0 0.0
        %446 = vmatprep.subr.mxu0 0.0
        %447 = vmatpush1.msra.mxu0 0.0
        %448 = vmatprep.subr.mxu0 0.0
        %449 = vmatpush1.msra.mxu0 0.0
        %450 = vmatprep.subr.mxu0 0.0
        %451 = vmatpush1.msra.mxu0 0.0
        %452 = vmatprep.subr.mxu0 0.0
        %453 = vmatpush1.msra.mxu0 0.0
        %454 = vmatprep.subr.mxu0 0.0
        %455 = vmatpush1.msra.mxu0 0.0
        %456 = vmatprep.subr.mxu0 0.0
        %457 = vmatpush1.msra.mxu0 0.0
        %458 = vmatprep.subr.mxu0 0.0
        %459 = vmatpush1.msra.mxu0 0.0
        %460 = vmatprep.subr.mxu0 0.0
        %461 = vmatpush1.msra.mxu0 0.0
        %462 = vmatprep.subr.mxu0 0.0
        %463 = vmatpush1.msra.mxu0 0.0
        %464 = vmatprep.subr.mxu0 0.0
        %465 = vmatpush1.msra.mxu0 0.0
        %466 = vmatprep.subr.mxu0 %v434
        %467 = vmatpush1.msra.mxu0 %v431
        %468 = vmatprep.subr.mxu0 0.0
        %469 = vmatpush2.msra.mxu0 0.0
        %470 = vmatprep.subr.mxu0 0.0
        %471 = vmatpush2.msra.mxu0 0.0
        %472 = vmatprep.subr.mxu0 0.0
        %473 = vmatpush2.msra.mxu0 0.0
        %474 = vmatprep.subr.mxu0 0.0
        %475 = vmatpush2.msra.mxu0 0.0
        %476 = vmatprep.subr.mxu0 0.0
        %477 = vmatpush2.msra.mxu0 0.0
        %478 = vmatprep.subr.mxu0 0.0
        %479 = vmatpush2.msra.mxu0 0.0
        %480 = vmatprep.subr.mxu0 0.0
        %481 = vmatpush2.msra.mxu0 0.0
        %482 = vmatprep.subr.mxu0 0.0
        %483 = vmatpush2.msra.mxu0 0.0
        %484 = vmatprep.subr.mxu0 0.0
        %485 = vmatpush2.msra.mxu0 0.0
        %486 = vmatprep.subr.mxu0 0.0
        %487 = vmatpush2.msra.mxu0 0.0
        %488 = vmatprep.subr.mxu0 0.0
        %489 = vmatpush2.msra.mxu0 0.0
        %490 = vmatprep.subr.mxu0 0.0
        %491 = vmatpush2.msra.mxu0 0.0
        %492 = vmatprep.subr.mxu0 0.0
        %493 = vmatpush2.msra.mxu0 0.0
        %494 = vmatprep.subr.mxu0 0.0
        %495 = vmatpush2.msra.mxu0 0.0
        %496 = vmatprep.subr.mxu0 0.0
        %497 = vmatpush2.msra.mxu0 0.0
        %498 = vmatprep.subr.mxu0 0.0
        %499 = vmatpush2.msra.mxu0 0.0
        %500 = vmatprep.mubr.f32.mxu0 0.0
        %501 = vmatmul.mubr.f32.gmra.mxu0 %v407
        %v502 = vpop.f32.mrf.mxu0
        %v503 = vadd.f32 0.0, %v502
        %v504 = vpop.f32.mrf.mxu0
        %v505 = vadd.f32 0.0, %v504
        %506 = vmatprep.mubr.f32.mxu0 0.0
        %507 = vmatmul.mubr.f32.gmra.mxu0 %v410
        %v508 = vpop.f32.mrf.mxu0
        %v509 = vadd.f32 0.0, %v508
        %v510 = vpop.f32.mrf.mxu0
        %v511 = vadd.f32 0.0, %v510
        %512 = vmatprep.mubr.f32.mxu0 0.0
        %513 = vmatmul.mubr.f32.gmra.mxu0 %v413
        %v514 = vpop.f32.mrf.mxu0
        %v515 = vadd.f32 0.0, %v514
        %v516 = vpop.f32.mrf.mxu0
        %v517 = vadd.f32 0.0, %v516
        %518 = vmatprep.mubr.f32.mxu0 0.0
        %519 = vmatmul.mubr.f32.gmra.mxu0 %v416
        %v520 = vpop.f32.mrf.mxu0
        %v521 = vadd.f32 0.0, %v520
        %v522 = vpop.f32.mrf.mxu0
        %v523 = vadd.f32 0.0, %v522
        %524 = vmatprep.mubr.f32.mxu0 0.0
        %525 = vmatmul.mubr.f32.gmra.mxu0 %v419
        %v526 = vpop.f32.mrf.mxu0
        %v527 = vadd.f32 0.0, %v526
        %v528 = vpop.f32.mrf.mxu0
        %v529 = vadd.f32 0.0, %v528
        %530 = vmatprep.mubr.f32.mxu0 0.0
        %531 = vmatmul.mubr.f32.gmra.mxu0 %v422
        %v532 = vpop.f32.mrf.mxu0
        %v533 = vadd.f32 0.0, %v532
        %v534 = vpop.f32.mrf.mxu0
        %v535 = vadd.f32 0.0, %v534
        %536 = vmatprep.mubr.f32.mxu0 0.0
        %537 = vmatmul.mubr.f32.gmra.mxu0 %v425
        %v538 = vpop.f32.mrf.mxu0
        %v539 = vadd.f32 0.0, %v538
        %v540 = vpop.f32.mrf.mxu0
        %v541 = vadd.f32 0.0, %v540
        %542 = vmatprep.mubr.f32.mxu0 0.0
        %543 = vmatmul.mubr.f32.gmra.mxu0 %v428
        %v544 = vpop.f32.mrf.mxu0
        %v545 = vadd.f32 0.0, %v544
        %v546 = vpop.f32.mrf.mxu0
        %v547 = vadd.f32 0.0, %v546
        %548 = vdwg.mxu0
        %v549 = vadd.f32 %v371, %v503
        %v550 = vadd.f32 %v372, %v505
        %v551 = vadd.f32 %v373, %v509
        %v552 = vadd.f32 %v374, %v511
        %v553 = vadd.f32 %v375, %v515
        %v554 = vadd.f32 %v376, %v517
        %v555 = vadd.f32 %v377, %v521
        %v556 = vadd.f32 %v378, %v523
        %v557 = vadd.f32 %v379, %v527
        %v558 = vadd.f32 %v380, %v529
        %v559 = vadd.f32 %v381, %v533
        %v560 = vadd.f32 %v382, %v535
        %v561 = vadd.f32 %v383, %v539
        %v562 = vadd.f32 %v384, %v541
        %v563 = vadd.f32 %v385, %v545
        %v564 = vadd.f32 %v386, %v547
        %565 = vrot.lane.b32.xlu0 %v217, 126
        %v566 = vpop.permute.xlu0 %565
        %567 = vrot.lane.b32.xlu0 %v227, 126
        %v568 = vpop.permute.xlu0 %567
        %vm569 = vcmp.lt.s32.totalorder %v393, 126
        %v570 = vsel %vm569, %v566, %v568
        %v571 = vsel %vm569, %v568, %v566
        %s572 = scalar_lea.vmem %s1, 128
        %v573 = vld [vmem:[%s572] sm:$0xff]
        %v574 = vld [vmem:[%s572 + $0x8] sm:$0xff]
        %v575 = vld [vmem:[%s572 + $0x10] sm:$0xff]
        %v576 = vld [vmem:[%s572 + $0x18] sm:$0xff]
        %v577 = vld [vmem:[%s572 + $0x20] sm:$0xff]
        %v578 = vld [vmem:[%s572 + $0x28] sm:$0xff]
        %v579 = vld [vmem:[%s572 + $0x30] sm:$0xff]
        %v580 = vld [vmem:[%s572 + $0x38] sm:$0xff]
        %v582 = vsel %vm228, %v573, 0
        %v585 = vsel %vm228, %v574, 0
        %v588 = vsel %vm228, %v575, 0
        %v591 = vsel %vm228, %v576, 0
        %v594 = vsel %vm228, %v577, 0
        %v597 = vsel %vm228, %v578, 0
        %v600 = vsel %vm228, %v579, 0
        %v603 = vsel %vm228, %v580, 0
        %v606 = vsel %vm253, %v570, 0
        %v609 = vsel %vm253, %v571, 0
        %611 = vmatprep.subr.mxu0 0.0
        %612 = vmatpush1.msra.mxu0 0.0
        %613 = vmatprep.subr.mxu0 0.0
        %614 = vmatpush1.msra.mxu0 0.0
        %615 = vmatprep.subr.mxu0 0.0
        %616 = vmatpush1.msra.mxu0 0.0
        %617 = vmatprep.subr.mxu0 0.0
        %618 = vmatpush1.msra.mxu0 0.0
        %619 = vmatprep.subr.mxu0 0.0
        %620 = vmatpush1.msra.mxu0 0.0
        %621 = vmatprep.subr.mxu0 0.0
        %622 = vmatpush1.msra.mxu0 0.0
        %623 = vmatprep.subr.mxu0 0.0
        %624 = vmatpush1.msra.mxu0 0.0
        %625 = vmatprep.subr.mxu0 0.0
        %626 = vmatpush1.msra.mxu0 0.0
        %627 = vmatprep.subr.mxu0 0.0
        %628 = vmatpush1.msra.mxu0 0.0
        %629 = vmatprep.subr.mxu0 0.0
        %630 = vmatpush1.msra.mxu0 0.0
        %631 = vmatprep.subr.mxu0 0.0
        %632 = vmatpush1.msra.mxu0 0.0
        %633 = vmatprep.subr.mxu0 0.0
        %634 = vmatpush1.msra.mxu0 0.0
        %635 = vmatprep.subr.mxu0 0.0
        %636 = vmatpush1.msra.mxu0 0.0
        %637 = vmatprep.subr.mxu0 0.0
        %638 = vmatpush1.msra.mxu0 0.0
        %639 = vmatprep.subr.mxu0 0.0
        %640 = vmatpush1.msra.mxu0 0.0
        %641 = vmatprep.subr.mxu0 %v609
        %642 = vmatpush1.msra.mxu0 %v606
        %643 = vmatprep.subr.mxu0 0.0
        %644 = vmatpush2.msra.mxu0 0.0
        %645 = vmatprep.subr.mxu0 0.0
        %646 = vmatpush2.msra.mxu0 0.0
        %647 = vmatprep.subr.mxu0 0.0
        %648 = vmatpush2.msra.mxu0 0.0
        %649 = vmatprep.subr.mxu0 0.0
        %650 = vmatpush2.msra.mxu0 0.0
        %651 = vmatprep.subr.mxu0 0.0
        %652 = vmatpush2.msra.mxu0 0.0
        %653 = vmatprep.subr.mxu0 0.0
        %654 = vmatpush2.msra.mxu0 0.0
        %655 = vmatprep.subr.mxu0 0.0
        %656 = vmatpush2.msra.mxu0 0.0
        %657 = vmatprep.subr.mxu0 0.0
        %658 = vmatpush2.msra.mxu0 0.0
        %659 = vmatprep.subr.mxu0 0.0
        %660 = vmatpush2.msra.mxu0 0.0
        %661 = vmatprep.subr.mxu0 0.0
        %662 = vmatpush2.msra.mxu0 0.0
        %663 = vmatprep.subr.mxu0 0.0
        %664 = vmatpush2.msra.mxu0 0.0
        %665 = vmatprep.subr.mxu0 0.0
        %666 = vmatpush2.msra.mxu0 0.0
        %667 = vmatprep.subr.mxu0 0.0
        %668 = vmatpush2.msra.mxu0 0.0
        %669 = vmatprep.subr.mxu0 0.0
        %670 = vmatpush2.msra.mxu0 0.0
        %671 = vmatprep.subr.mxu0 0.0
        %672 = vmatpush2.msra.mxu0 0.0
        %673 = vmatprep.subr.mxu0 0.0
        %674 = vmatpush2.msra.mxu0 0.0
        %675 = vmatprep.mubr.f32.mxu0 0.0
        %676 = vmatmul.mubr.f32.gmra.mxu0 %v582
        %v677 = vpop.f32.mrf.mxu0
        %v678 = vadd.f32 0.0, %v677
        %v679 = vpop.f32.mrf.mxu0
        %v680 = vadd.f32 0.0, %v679
        %681 = vmatprep.mubr.f32.mxu0 0.0
        %682 = vmatmul.mubr.f32.gmra.mxu0 %v585
        %v683 = vpop.f32.mrf.mxu0
        %v684 = vadd.f32 0.0, %v683
        %v685 = vpop.f32.mrf.mxu0
        %v686 = vadd.f32 0.0, %v685
        %687 = vmatprep.mubr.f32.mxu0 0.0
        %688 = vmatmul.mubr.f32.gmra.mxu0 %v588
        %v689 = vpop.f32.mrf.mxu0
        %v690 = vadd.f32 0.0, %v689
        %v691 = vpop.f32.mrf.mxu0
        %v692 = vadd.f32 0.0, %v691
        %693 = vmatprep.mubr.f32.mxu0 0.0
        %694 = vmatmul.mubr.f32.gmra.mxu0 %v591
        %v695 = vpop.f32.mrf.mxu0
        %v696 = vadd.f32 0.0, %v695
        %v697 = vpop.f32.mrf.mxu0
        %v698 = vadd.f32 0.0, %v697
        %699 = vmatprep.mubr.f32.mxu0 0.0
        %700 = vmatmul.mubr.f32.gmra.mxu0 %v594
        %v701 = vpop.f32.mrf.mxu0
        %v702 = vadd.f32 0.0, %v701
        %v703 = vpop.f32.mrf.mxu0
        %v704 = vadd.f32 0.0, %v703
        %705 = vmatprep.mubr.f32.mxu0 0.0
        %706 = vmatmul.mubr.f32.gmra.mxu0 %v597
        %v707 = vpop.f32.mrf.mxu0
        %v708 = vadd.f32 0.0, %v707
        %v709 = vpop.f32.mrf.mxu0
        %v710 = vadd.f32 0.0, %v709
        %711 = vmatprep.mubr.f32.mxu0 0.0
        %712 = vmatmul.mubr.f32.gmra.mxu0 %v600
        %v713 = vpop.f32.mrf.mxu0
        %v714 = vadd.f32 0.0, %v713
        %v715 = vpop.f32.mrf.mxu0
        %v716 = vadd.f32 0.0, %v715
        %717 = vmatprep.mubr.f32.mxu0 0.0
        %718 = vmatmul.mubr.f32.gmra.mxu0 %v603
        %v719 = vpop.f32.mrf.mxu0
        %v720 = vadd.f32 0.0, %v719
        %v721 = vpop.f32.mrf.mxu0
        %v722 = vadd.f32 0.0, %v721
        %723 = vdwg.mxu0
        %v724 = vadd.f32 %v549, %v678
        %v725 = vadd.f32 %v550, %v680
        %v726 = vadd.f32 %v551, %v684
        %v727 = vadd.f32 %v552, %v686
        %v728 = vadd.f32 %v553, %v690
        %v729 = vadd.f32 %v554, %v692
        %v730 = vadd.f32 %v555, %v696
        %v731 = vadd.f32 %v556, %v698
        %v732 = vadd.f32 %v557, %v702
        %v733 = vadd.f32 %v558, %v704
        %v734 = vadd.f32 %v559, %v708
        %v735 = vadd.f32 %v560, %v710
        %v736 = vadd.f32 %v561, %v714
        %v737 = vadd.f32 %v562, %v716
        %v738 = vadd.f32 %v563, %v720
        %v739 = vadd.f32 %v564, %v722
        %740 = vrot.lane.b32.xlu0 %v217, 112
        %v741 = vpop.permute.xlu0 %740
        %742 = vrot.lane.b32.xlu0 %v227, 112
        %v743 = vpop.permute.xlu0 %742
        %vm744 = vcmp.lt.s32.totalorder %v393, 112
        %v745 = vsel %vm744, %v741, %v743
        %v746 = vsel %vm744, %v743, %v741
        %s747 = scalar_lea.vmem %s1, 192
        %v748 = vld [vmem:[%s747] sm:$0xff]
        %v749 = vld [vmem:[%s747 + $0x8] sm:$0xff]
        %v750 = vld [vmem:[%s747 + $0x10] sm:$0xff]
        %v751 = vld [vmem:[%s747 + $0x18] sm:$0xff]
        %v752 = vld [vmem:[%s747 + $0x20] sm:$0xff]
        %v753 = vld [vmem:[%s747 + $0x28] sm:$0xff]
        %v754 = vld [vmem:[%s747 + $0x30] sm:$0xff]
        %v755 = vld [vmem:[%s747 + $0x38] sm:$0xff]
        %v757 = vsel %vm228, %v748, 0
        %v760 = vsel %vm228, %v749, 0
        %v763 = vsel %vm228, %v750, 0
        %v766 = vsel %vm228, %v751, 0
        %v769 = vsel %vm228, %v752, 0
        %v772 = vsel %vm228, %v753, 0
        %v775 = vsel %vm228, %v754, 0
        %v778 = vsel %vm228, %v755, 0
        %v781 = vsel %vm253, %v745, 0
        %v784 = vsel %vm253, %v746, 0
        %786 = vmatprep.subr.mxu0 0.0
        %787 = vmatpush1.msra.mxu0 0.0
        %788 = vmatprep.subr.mxu0 0.0
        %789 = vmatpush1.msra.mxu0 0.0
        %790 = vmatprep.subr.mxu0 0.0
        %791 = vmatpush1.msra.mxu0 0.0
        %792 = vmatprep.subr.mxu0 0.0
        %793 = vmatpush1.msra.mxu0 0.0
        %794 = vmatprep.subr.mxu0 0.0
        %795 = vmatpush1.msra.mxu0 0.0
        %796 = vmatprep.subr.mxu0 0.0
        %797 = vmatpush1.msra.mxu0 0.0
        %798 = vmatprep.subr.mxu0 0.0
        %799 = vmatpush1.msra.mxu0 0.0
        %800 = vmatprep.subr.mxu0 0.0
        %801 = vmatpush1.msra.mxu0 0.0
        %802 = vmatprep.subr.mxu0 0.0
        %803 = vmatpush1.msra.mxu0 0.0
        %804 = vmatprep.subr.mxu0 0.0
        %805 = vmatpush1.msra.mxu0 0.0
        %806 = vmatprep.subr.mxu0 0.0
        %807 = vmatpush1.msra.mxu0 0.0
        %808 = vmatprep.subr.mxu0 0.0
        %809 = vmatpush1.msra.mxu0 0.0
        %810 = vmatprep.subr.mxu0 0.0
        %811 = vmatpush1.msra.mxu0 0.0
        %812 = vmatprep.subr.mxu0 0.0
        %813 = vmatpush1.msra.mxu0 0.0
        %814 = vmatprep.subr.mxu0 0.0
        %815 = vmatpush1.msra.mxu0 0.0
        %816 = vmatprep.subr.mxu0 %v784
        %817 = vmatpush1.msra.mxu0 %v781
        %818 = vmatprep.subr.mxu0 0.0
        %819 = vmatpush2.msra.mxu0 0.0
        %820 = vmatprep.subr.mxu0 0.0
        %821 = vmatpush2.msra.mxu0 0.0
        %822 = vmatprep.subr.mxu0 0.0
        %823 = vmatpush2.msra.mxu0 0.0
        %824 = vmatprep.subr.mxu0 0.0
        %825 = vmatpush2.msra.mxu0 0.0
        %826 = vmatprep.subr.mxu0 0.0
        %827 = vmatpush2.msra.mxu0 0.0
        %828 = vmatprep.subr.mxu0 0.0
        %829 = vmatpush2.msra.mxu0 0.0
        %830 = vmatprep.subr.mxu0 0.0
        %831 = vmatpush2.msra.mxu0 0.0
        %832 = vmatprep.subr.mxu0 0.0
        %833 = vmatpush2.msra.mxu0 0.0
        %834 = vmatprep.subr.mxu0 0.0
        %835 = vmatpush2.msra.mxu0 0.0
        %836 = vmatprep.subr.mxu0 0.0
        %837 = vmatpush2.msra.mxu0 0.0
        %838 = vmatprep.subr.mxu0 0.0
        %839 = vmatpush2.msra.mxu0 0.0
        %840 = vmatprep.subr.mxu0 0.0
        %841 = vmatpush2.msra.mxu0 0.0
        %842 = vmatprep.subr.mxu0 0.0
        %843 = vmatpush2.msra.mxu0 0.0
        %844 = vmatprep.subr.mxu0 0.0
        %845 = vmatpush2.msra.mxu0 0.0
        %846 = vmatprep.subr.mxu0 0.0
        %847 = vmatpush2.msra.mxu0 0.0
        %848 = vmatprep.subr.mxu0 0.0
        %849 = vmatpush2.msra.mxu0 0.0
        %850 = vmatprep.mubr.f32.mxu0 0.0
        %851 = vmatmul.mubr.f32.gmra.mxu0 %v757
        %v852 = vpop.f32.mrf.mxu0
        %v853 = vadd.f32 0.0, %v852
        %v854 = vpop.f32.mrf.mxu0
        %v855 = vadd.f32 0.0, %v854
        %856 = vmatprep.mubr.f32.mxu0 0.0
        %857 = vmatmul.mubr.f32.gmra.mxu0 %v760
        %v858 = vpop.f32.mrf.mxu0
        %v859 = vadd.f32 0.0, %v858
        %v860 = vpop.f32.mrf.mxu0
        %v861 = vadd.f32 0.0, %v860
        %862 = vmatprep.mubr.f32.mxu0 0.0
        %863 = vmatmul.mubr.f32.gmra.mxu0 %v763
        %v864 = vpop.f32.mrf.mxu0
        %v865 = vadd.f32 0.0, %v864
        %v866 = vpop.f32.mrf.mxu0
        %v867 = vadd.f32 0.0, %v866
        %868 = vmatprep.mubr.f32.mxu0 0.0
        %869 = vmatmul.mubr.f32.gmra.mxu0 %v766
        %v870 = vpop.f32.mrf.mxu0
        %v871 = vadd.f32 0.0, %v870
        %v872 = vpop.f32.mrf.mxu0
        %v873 = vadd.f32 0.0, %v872
        %874 = vmatprep.mubr.f32.mxu0 0.0
        %875 = vmatmul.mubr.f32.gmra.mxu0 %v769
        %v876 = vpop.f32.mrf.mxu0
        %v877 = vadd.f32 0.0, %v876
        %v878 = vpop.f32.mrf.mxu0
        %v879 = vadd.f32 0.0, %v878
        %880 = vmatprep.mubr.f32.mxu0 0.0
        %881 = vmatmul.mubr.f32.gmra.mxu0 %v772
        %v882 = vpop.f32.mrf.mxu0
        %v883 = vadd.f32 0.0, %v882
        %v884 = vpop.f32.mrf.mxu0
        %v885 = vadd.f32 0.0, %v884
        %886 = vmatprep.mubr.f32.mxu0 0.0
        %887 = vmatmul.mubr.f32.gmra.mxu0 %v775
        %v888 = vpop.f32.mrf.mxu0
        %v889 = vadd.f32 0.0, %v888
        %v890 = vpop.f32.mrf.mxu0
        %v891 = vadd.f32 0.0, %v890
        %892 = vmatprep.mubr.f32.mxu0 0.0
        %893 = vmatmul.mubr.f32.gmra.mxu0 %v778
        %v894 = vpop.f32.mrf.mxu0
        %v895 = vadd.f32 0.0, %v894
        %v896 = vpop.f32.mrf.mxu0
        %v897 = vadd.f32 0.0, %v896
        %898 = vdwg.mxu0
        %v899 = vadd.f32 %v724, %v853
        %v900 = vadd.f32 %v725, %v855
        %v901 = vadd.f32 %v726, %v859
        %v902 = vadd.f32 %v727, %v861
        %v903 = vadd.f32 %v728, %v865
        %v904 = vadd.f32 %v729, %v867
        %v905 = vadd.f32 %v730, %v871
        %v906 = vadd.f32 %v731, %v873
        %v907 = vadd.f32 %v732, %v877
        %v908 = vadd.f32 %v733, %v879
        %v909 = vadd.f32 %v734, %v883
        %v910 = vadd.f32 %v735, %v885
        %v911 = vadd.f32 %v736, %v889
        %v912 = vadd.f32 %v737, %v891
        %v913 = vadd.f32 %v738, %v895
        %v914 = vadd.f32 %v739, %v897
        %915 = vrot.lane.b32.xlu0 %v217, 111
        %v916 = vpop.permute.xlu0 %915
        %917 = vrot.lane.b32.xlu0 %v227, 111
        %v918 = vpop.permute.xlu0 %917
        %vm919 = vcmp.lt.s32.totalorder %v393, 111
        %v920 = vsel %vm919, %v916, %v918
        %v921 = vsel %vm919, %v918, %v916
        %s922 = scalar_lea.vmem %s1, 256
        %v923 = vld [vmem:[%s922] sm:$0xff]
        %v924 = vld [vmem:[%s922 + $0x8] sm:$0xff]
        %v925 = vld [vmem:[%s922 + $0x10] sm:$0xff]
        %v926 = vld [vmem:[%s922 + $0x18] sm:$0xff]
        %v927 = vld [vmem:[%s922 + $0x20] sm:$0xff]
        %v928 = vld [vmem:[%s922 + $0x28] sm:$0xff]
        %v929 = vld [vmem:[%s922 + $0x30] sm:$0xff]
        %v930 = vld [vmem:[%s922 + $0x38] sm:$0xff]
        %v932 = vsel %vm228, %v923, 0
        %v935 = vsel %vm228, %v924, 0
        %v938 = vsel %vm228, %v925, 0
        %v941 = vsel %vm228, %v926, 0
        %v944 = vsel %vm228, %v927, 0
        %v947 = vsel %vm228, %v928, 0
        %v950 = vsel %vm228, %v929, 0
        %v953 = vsel %vm228, %v930, 0
        %v956 = vsel %vm253, %v920, 0
        %v959 = vsel %vm253, %v921, 0
        %961 = vmatprep.subr.mxu0 0.0
        %962 = vmatpush1.msra.mxu0 0.0
        %963 = vmatprep.subr.mxu0 0.0
        %964 = vmatpush1.msra.mxu0 0.0
        %965 = vmatprep.subr.mxu0 0.0
        %966 = vmatpush1.msra.mxu0 0.0
        %967 = vmatprep.subr.mxu0 0.0
        %968 = vmatpush1.msra.mxu0 0.0
        %969 = vmatprep.subr.mxu0 0.0
        %970 = vmatpush1.msra.mxu0 0.0
        %971 = vmatprep.subr.mxu0 0.0
        %972 = vmatpush1.msra.mxu0 0.0
        %973 = vmatprep.subr.mxu0 0.0
        %974 = vmatpush1.msra.mxu0 0.0
        %975 = vmatprep.subr.mxu0 0.0
        %976 = vmatpush1.msra.mxu0 0.0
        %977 = vmatprep.subr.mxu0 0.0
        %978 = vmatpush1.msra.mxu0 0.0
        %979 = vmatprep.subr.mxu0 0.0
        %980 = vmatpush1.msra.mxu0 0.0
        %981 = vmatprep.subr.mxu0 0.0
        %982 = vmatpush1.msra.mxu0 0.0
        %983 = vmatprep.subr.mxu0 0.0
        %984 = vmatpush1.msra.mxu0 0.0
        %985 = vmatprep.subr.mxu0 0.0
        %986 = vmatpush1.msra.mxu0 0.0
        %987 = vmatprep.subr.mxu0 0.0
        %988 = vmatpush1.msra.mxu0 0.0
        %989 = vmatprep.subr.mxu0 0.0
        %990 = vmatpush1.msra.mxu0 0.0
        %991 = vmatprep.subr.mxu0 %v959
        %992 = vmatpush1.msra.mxu0 %v956
        %993 = vmatprep.subr.mxu0 0.0
        %994 = vmatpush2.msra.mxu0 0.0
        %995 = vmatprep.subr.mxu0 0.0
        %996 = vmatpush2.msra.mxu0 0.0
        %997 = vmatprep.subr.mxu0 0.0
        %998 = vmatpush2.msra.mxu0 0.0
        %999 = vmatprep.subr.mxu0 0.0
        %1000 = vmatpush2.msra.mxu0 0.0
        %1001 = vmatprep.subr.mxu0 0.0
        %1002 = vmatpush2.msra.mxu0 0.0
        %1003 = vmatprep.subr.mxu0 0.0
        %1004 = vmatpush2.msra.mxu0 0.0
        %1005 = vmatprep.subr.mxu0 0.0
        %1006 = vmatpush2.msra.mxu0 0.0
        %1007 = vmatprep.subr.mxu0 0.0
        %1008 = vmatpush2.msra.mxu0 0.0
        %1009 = vmatprep.subr.mxu0 0.0
        %1010 = vmatpush2.msra.mxu0 0.0
        %1011 = vmatprep.subr.mxu0 0.0
        %1012 = vmatpush2.msra.mxu0 0.0
        %1013 = vmatprep.subr.mxu0 0.0
        %1014 = vmatpush2.msra.mxu0 0.0
        %1015 = vmatprep.subr.mxu0 0.0
        %1016 = vmatpush2.msra.mxu0 0.0
        %1017 = vmatprep.subr.mxu0 0.0
        %1018 = vmatpush2.msra.mxu0 0.0
        %1019 = vmatprep.subr.mxu0 0.0
        %1020 = vmatpush2.msra.mxu0 0.0
        %1021 = vmatprep.subr.mxu0 0.0
        %1022 = vmatpush2.msra.mxu0 0.0
        %1023 = vmatprep.subr.mxu0 0.0
        %1024 = vmatpush2.msra.mxu0 0.0
        %1025 = vmatprep.mubr.f32.mxu0 0.0
        %1026 = vmatmul.mubr.f32.gmra.mxu0 %v932
        %v1027 = vpop.f32.mrf.mxu0
        %v1028 = vadd.f32 0.0, %v1027
        %v1029 = vpop.f32.mrf.mxu0
        %v1030 = vadd.f32 0.0, %v1029
        %1031 = vmatprep.mubr.f32.mxu0 0.0
        %1032 = vmatmul.mubr.f32.gmra.mxu0 %v935
        %v1033 = vpop.f32.mrf.mxu0
        %v1034 = vadd.f32 0.0, %v1033
        %v1035 = vpop.f32.mrf.mxu0
        %v1036 = vadd.f32 0.0, %v1035
        %1037 = vmatprep.mubr.f32.mxu0 0.0
        %1038 = vmatmul.mubr.f32.gmra.mxu0 %v938
        %v1039 = vpop.f32.mrf.mxu0
        %v1040 = vadd.f32 0.0, %v1039
        %v1041 = vpop.f32.mrf.mxu0
        %v1042 = vadd.f32 0.0, %v1041
        %1043 = vmatprep.mubr.f32.mxu0 0.0
        %1044 = vmatmul.mubr.f32.gmra.mxu0 %v941
        %v1045 = vpop.f32.mrf.mxu0
        %v1046 = vadd.f32 0.0, %v1045
        %v1047 = vpop.f32.mrf.mxu0
        %v1048 = vadd.f32 0.0, %v1047
        %1049 = vmatprep.mubr.f32.mxu0 0.0
        %1050 = vmatmul.mubr.f32.gmra.mxu0 %v944
        %v1051 = vpop.f32.mrf.mxu0
        %v1052 = vadd.f32 0.0, %v1051
        %v1053 = vpop.f32.mrf.mxu0
        %v1054 = vadd.f32 0.0, %v1053
        %1055 = vmatprep.mubr.f32.mxu0 0.0
        %1056 = vmatmul.mubr.f32.gmra.mxu0 %v947
        %v1057 = vpop.f32.mrf.mxu0
        %v1058 = vadd.f32 0.0, %v1057
        %v1059 = vpop.f32.mrf.mxu0
        %v1060 = vadd.f32 0.0, %v1059
        %1061 = vmatprep.mubr.f32.mxu0 0.0
        %1062 = vmatmul.mubr.f32.gmra.mxu0 %v950
        %v1063 = vpop.f32.mrf.mxu0
        %v1064 = vadd.f32 0.0, %v1063
        %v1065 = vpop.f32.mrf.mxu0
        %v1066 = vadd.f32 0.0, %v1065
        %1067 = vmatprep.mubr.f32.mxu0 0.0
        %1068 = vmatmul.mubr.f32.gmra.mxu0 %v953
        %v1069 = vpop.f32.mrf.mxu0
        %v1070 = vadd.f32 0.0, %v1069
        %v1071 = vpop.f32.mrf.mxu0
        %v1072 = vadd.f32 0.0, %v1071
        %1073 = vdwg.mxu0
        %v1074 = vadd.f32 %v899, %v1028
        %v1075 = vadd.f32 %v900, %v1030
        %v1076 = vadd.f32 %v901, %v1034
        %v1077 = vadd.f32 %v902, %v1036
        %v1078 = vadd.f32 %v903, %v1040
        %v1079 = vadd.f32 %v904, %v1042
        %v1080 = vadd.f32 %v905, %v1046
        %v1081 = vadd.f32 %v906, %v1048
        %v1082 = vadd.f32 %v907, %v1052
        %v1083 = vadd.f32 %v908, %v1054
        %v1084 = vadd.f32 %v909, %v1058
        %v1085 = vadd.f32 %v910, %v1060
        %v1086 = vadd.f32 %v911, %v1064
        %v1087 = vadd.f32 %v912, %v1066
        %v1088 = vadd.f32 %v913, %v1070
        %v1089 = vadd.f32 %v914, %v1072
        %1090 = vrot.lane.b32.xlu0 %v217, 110
        %v1091 = vpop.permute.xlu0 %1090
        %1092 = vrot.lane.b32.xlu0 %v227, 110
        %v1093 = vpop.permute.xlu0 %1092
        %vm1094 = vcmp.lt.s32.totalorder %v393, 110
        %v1095 = vsel %vm1094, %v1091, %v1093
        %v1096 = vsel %vm1094, %v1093, %v1091
        %s1097 = scalar_lea.vmem %s1, 320
        %v1098 = vld [vmem:[%s1097] sm:$0xff]
        %v1099 = vld [vmem:[%s1097 + $0x8] sm:$0xff]
        %v1100 = vld [vmem:[%s1097 + $0x10] sm:$0xff]
        %v1101 = vld [vmem:[%s1097 + $0x18] sm:$0xff]
        %v1102 = vld [vmem:[%s1097 + $0x20] sm:$0xff]
        %v1103 = vld [vmem:[%s1097 + $0x28] sm:$0xff]
        %v1104 = vld [vmem:[%s1097 + $0x30] sm:$0xff]
        %v1105 = vld [vmem:[%s1097 + $0x38] sm:$0xff]
        %v1107 = vsel %vm228, %v1098, 0
        %v1110 = vsel %vm228, %v1099, 0
        %v1113 = vsel %vm228, %v1100, 0
        %v1116 = vsel %vm228, %v1101, 0
        %v1119 = vsel %vm228, %v1102, 0
        %v1122 = vsel %vm228, %v1103, 0
        %v1125 = vsel %vm228, %v1104, 0
        %v1128 = vsel %vm228, %v1105, 0
        %v1131 = vsel %vm253, %v1095, 0
        %v1134 = vsel %vm253, %v1096, 0
        %1136 = vmatprep.subr.mxu0 0.0
        %1137 = vmatpush1.msra.mxu0 0.0
        %1138 = vmatprep.subr.mxu0 0.0
        %1139 = vmatpush1.msra.mxu0 0.0
        %1140 = vmatprep.subr.mxu0 0.0
        %1141 = vmatpush1.msra.mxu0 0.0
        %1142 = vmatprep.subr.mxu0 0.0
        %1143 = vmatpush1.msra.mxu0 0.0
        %1144 = vmatprep.subr.mxu0 0.0
        %1145 = vmatpush1.msra.mxu0 0.0
        %1146 = vmatprep.subr.mxu0 0.0
        %1147 = vmatpush1.msra.mxu0 0.0
        %1148 = vmatprep.subr.mxu0 0.0
        %1149 = vmatpush1.msra.mxu0 0.0
        %1150 = vmatprep.subr.mxu0 0.0
        %1151 = vmatpush1.msra.mxu0 0.0
        %1152 = vmatprep.subr.mxu0 0.0
        %1153 = vmatpush1.msra.mxu0 0.0
        %1154 = vmatprep.subr.mxu0 0.0
        %1155 = vmatpush1.msra.mxu0 0.0
        %1156 = vmatprep.subr.mxu0 0.0
        %1157 = vmatpush1.msra.mxu0 0.0
        %1158 = vmatprep.subr.mxu0 0.0
        %1159 = vmatpush1.msra.mxu0 0.0
        %1160 = vmatprep.subr.mxu0 0.0
        %1161 = vmatpush1.msra.mxu0 0.0
        %1162 = vmatprep.subr.mxu0 0.0
        %1163 = vmatpush1.msra.mxu0 0.0
        %1164 = vmatprep.subr.mxu0 0.0
        %1165 = vmatpush1.msra.mxu0 0.0
        %1166 = vmatprep.subr.mxu0 %v1134
        %1167 = vmatpush1.msra.mxu0 %v1131
        %1168 = vmatprep.subr.mxu0 0.0
        %1169 = vmatpush2.msra.mxu0 0.0
        %1170 = vmatprep.subr.mxu0 0.0
        %1171 = vmatpush2.msra.mxu0 0.0
        %1172 = vmatprep.subr.mxu0 0.0
        %1173 = vmatpush2.msra.mxu0 0.0
        %1174 = vmatprep.subr.mxu0 0.0
        %1175 = vmatpush2.msra.mxu0 0.0
        %1176 = vmatprep.subr.mxu0 0.0
        %1177 = vmatpush2.msra.mxu0 0.0
        %1178 = vmatprep.subr.mxu0 0.0
        %1179 = vmatpush2.msra.mxu0 0.0
        %1180 = vmatprep.subr.mxu0 0.0
        %1181 = vmatpush2.msra.mxu0 0.0
        %1182 = vmatprep.subr.mxu0 0.0
        %1183 = vmatpush2.msra.mxu0 0.0
        %1184 = vmatprep.subr.mxu0 0.0
        %1185 = vmatpush2.msra.mxu0 0.0
        %1186 = vmatprep.subr.mxu0 0.0
        %1187 = vmatpush2.msra.mxu0 0.0
        %1188 = vmatprep.subr.mxu0 0.0
        %1189 = vmatpush2.msra.mxu0 0.0
        %1190 = vmatprep.subr.mxu0 0.0
        %1191 = vmatpush2.msra.mxu0 0.0
        %1192 = vmatprep.subr.mxu0 0.0
        %1193 = vmatpush2.msra.mxu0 0.0
        %1194 = vmatprep.subr.mxu0 0.0
        %1195 = vmatpush2.msra.mxu0 0.0
        %1196 = vmatprep.subr.mxu0 0.0
        %1197 = vmatpush2.msra.mxu0 0.0
        %1198 = vmatprep.subr.mxu0 0.0
        %1199 = vmatpush2.msra.mxu0 0.0
        %1200 = vmatprep.mubr.f32.mxu0 0.0
        %1201 = vmatmul.mubr.f32.gmra.mxu0 %v1107
        %v1202 = vpop.f32.mrf.mxu0
        %v1203 = vadd.f32 0.0, %v1202
        %v1204 = vpop.f32.mrf.mxu0
        %v1205 = vadd.f32 0.0, %v1204
        %1206 = vmatprep.mubr.f32.mxu0 0.0
        %1207 = vmatmul.mubr.f32.gmra.mxu0 %v1110
        %v1208 = vpop.f32.mrf.mxu0
        %v1209 = vadd.f32 0.0, %v1208
        %v1210 = vpop.f32.mrf.mxu0
        %v1211 = vadd.f32 0.0, %v1210
        %1212 = vmatprep.mubr.f32.mxu0 0.0
        %1213 = vmatmul.mubr.f32.gmra.mxu0 %v1113
        %v1214 = vpop.f32.mrf.mxu0
        %v1215 = vadd.f32 0.0, %v1214
        %v1216 = vpop.f32.mrf.mxu0
        %v1217 = vadd.f32 0.0, %v1216
        %1218 = vmatprep.mubr.f32.mxu0 0.0
        %1219 = vmatmul.mubr.f32.gmra.mxu0 %v1116
        %v1220 = vpop.f32.mrf.mxu0
        %v1221 = vadd.f32 0.0, %v1220
        %v1222 = vpop.f32.mrf.mxu0
        %v1223 = vadd.f32 0.0, %v1222
        %1224 = vmatprep.mubr.f32.mxu0 0.0
        %1225 = vmatmul.mubr.f32.gmra.mxu0 %v1119
        %v1226 = vpop.f32.mrf.mxu0
        %v1227 = vadd.f32 0.0, %v1226
        %v1228 = vpop.f32.mrf.mxu0
        %v1229 = vadd.f32 0.0, %v1228
        %1230 = vmatprep.mubr.f32.mxu0 0.0
        %1231 = vmatmul.mubr.f32.gmra.mxu0 %v1122
        %v1232 = vpop.f32.mrf.mxu0
        %v1233 = vadd.f32 0.0, %v1232
        %v1234 = vpop.f32.mrf.mxu0
        %v1235 = vadd.f32 0.0, %v1234
        %1236 = vmatprep.mubr.f32.mxu0 0.0
        %1237 = vmatmul.mubr.f32.gmra.mxu0 %v1125
        %v1238 = vpop.f32.mrf.mxu0
        %v1239 = vadd.f32 0.0, %v1238
        %v1240 = vpop.f32.mrf.mxu0
        %v1241 = vadd.f32 0.0, %v1240
        %1242 = vmatprep.mubr.f32.mxu0 0.0
        %1243 = vmatmul.mubr.f32.gmra.mxu0 %v1128
        %v1244 = vpop.f32.mrf.mxu0
        %v1245 = vadd.f32 0.0, %v1244
        %v1246 = vpop.f32.mrf.mxu0
        %v1247 = vadd.f32 0.0, %v1246
        %1248 = vdwg.mxu0
        %v1249 = vadd.f32 %v1074, %v1203
        %v1250 = vadd.f32 %v1075, %v1205
        %v1251 = vadd.f32 %v1076, %v1209
        %v1252 = vadd.f32 %v1077, %v1211
        %v1253 = vadd.f32 %v1078, %v1215
        %v1254 = vadd.f32 %v1079, %v1217
        %v1255 = vadd.f32 %v1080, %v1221
        %v1256 = vadd.f32 %v1081, %v1223
        %v1257 = vadd.f32 %v1082, %v1227
        %v1258 = vadd.f32 %v1083, %v1229
        %v1259 = vadd.f32 %v1084, %v1233
        %v1260 = vadd.f32 %v1085, %v1235
        %v1261 = vadd.f32 %v1086, %v1239
        %v1262 = vadd.f32 %v1087, %v1241
        %v1263 = vadd.f32 %v1088, %v1245
        %v1264 = vadd.f32 %v1089, %v1247
        %1265 = vrot.lane.b32.xlu0 %v217, 96
        %v1266 = vpop.permute.xlu0 %1265
        %1267 = vrot.lane.b32.xlu0 %v227, 96
        %v1268 = vpop.permute.xlu0 %1267
        %vm1269 = vcmp.lt.s32.totalorder %v393, 96
        %v1270 = vsel %vm1269, %v1266, %v1268
        %v1271 = vsel %vm1269, %v1268, %v1266
        %s1272 = scalar_lea.vmem %s1, 384
        %v1273 = vld [vmem:[%s1272] sm:$0xff]
        %v1274 = vld [vmem:[%s1272 + $0x8] sm:$0xff]
        %v1275 = vld [vmem:[%s1272 + $0x10] sm:$0xff]
        %v1276 = vld [vmem:[%s1272 + $0x18] sm:$0xff]
        %v1277 = vld [vmem:[%s1272 + $0x20] sm:$0xff]
        %v1278 = vld [vmem:[%s1272 + $0x28] sm:$0xff]
        %v1279 = vld [vmem:[%s1272 + $0x30] sm:$0xff]
        %v1280 = vld [vmem:[%s1272 + $0x38] sm:$0xff]
        %v1282 = vsel %vm228, %v1273, 0
        %v1285 = vsel %vm228, %v1274, 0
        %v1288 = vsel %vm228, %v1275, 0
        %v1291 = vsel %vm228, %v1276, 0
        %v1294 = vsel %vm228, %v1277, 0
        %v1297 = vsel %vm228, %v1278, 0
        %v1300 = vsel %vm228, %v1279, 0
        %v1303 = vsel %vm228, %v1280, 0
        %v1306 = vsel %vm253, %v1270, 0
        %v1309 = vsel %vm253, %v1271, 0
        %1311 = vmatprep.subr.mxu0 0.0
        %1312 = vmatpush1.msra.mxu0 0.0
        %1313 = vmatprep.subr.mxu0 0.0
        %1314 = vmatpush1.msra.mxu0 0.0
        %1315 = vmatprep.subr.mxu0 0.0
        %1316 = vmatpush1.msra.mxu0 0.0
        %1317 = vmatprep.subr.mxu0 0.0
        %1318 = vmatpush1.msra.mxu0 0.0
        %1319 = vmatprep.subr.mxu0 0.0
        %1320 = vmatpush1.msra.mxu0 0.0
        %1321 = vmatprep.subr.mxu0 0.0
        %1322 = vmatpush1.msra.mxu0 0.0
        %1323 = vmatprep.subr.mxu0 0.0
        %1324 = vmatpush1.msra.mxu0 0.0
        %1325 = vmatprep.subr.mxu0 0.0
        %1326 = vmatpush1.msra.mxu0 0.0
        %1327 = vmatprep.subr.mxu0 0.0
        %1328 = vmatpush1.msra.mxu0 0.0
        %1329 = vmatprep.subr.mxu0 0.0
        %1330 = vmatpush1.msra.mxu0 0.0
        %1331 = vmatprep.subr.mxu0 0.0
        %1332 = vmatpush1.msra.mxu0 0.0
        %1333 = vmatprep.subr.mxu0 0.0
        %1334 = vmatpush1.msra.mxu0 0.0
        %1335 = vmatprep.subr.mxu0 0.0
        %1336 = vmatpush1.msra.mxu0 0.0
        %1337 = vmatprep.subr.mxu0 0.0
        %1338 = vmatpush1.msra.mxu0 0.0
        %1339 = vmatprep.subr.mxu0 0.0
        %1340 = vmatpush1.msra.mxu0 0.0
        %1341 = vmatprep.subr.mxu0 %v1309
        %1342 = vmatpush1.msra.mxu0 %v1306
        %1343 = vmatprep.subr.mxu0 0.0
        %1344 = vmatpush2.msra.mxu0 0.0
        %1345 = vmatprep.subr.mxu0 0.0
        %1346 = vmatpush2.msra.mxu0 0.0
        %1347 = vmatprep.subr.mxu0 0.0
        %1348 = vmatpush2.msra.mxu0 0.0
        %1349 = vmatprep.subr.mxu0 0.0
        %1350 = vmatpush2.msra.mxu0 0.0
        %1351 = vmatprep.subr.mxu0 0.0
        %1352 = vmatpush2.msra.mxu0 0.0
        %1353 = vmatprep.subr.mxu0 0.0
        %1354 = vmatpush2.msra.mxu0 0.0
        %1355 = vmatprep.subr.mxu0 0.0
        %1356 = vmatpush2.msra.mxu0 0.0
        %1357 = vmatprep.subr.mxu0 0.0
        %1358 = vmatpush2.msra.mxu0 0.0
        %1359 = vmatprep.subr.mxu0 0.0
        %1360 = vmatpush2.msra.mxu0 0.0
        %1361 = vmatprep.subr.mxu0 0.0
        %1362 = vmatpush2.msra.mxu0 0.0
        %1363 = vmatprep.subr.mxu0 0.0
        %1364 = vmatpush2.msra.mxu0 0.0
        %1365 = vmatprep.subr.mxu0 0.0
        %1366 = vmatpush2.msra.mxu0 0.0
        %1367 = vmatprep.subr.mxu0 0.0
        %1368 = vmatpush2.msra.mxu0 0.0
        %1369 = vmatprep.subr.mxu0 0.0
        %1370 = vmatpush2.msra.mxu0 0.0
        %1371 = vmatprep.subr.mxu0 0.0
        %1372 = vmatpush2.msra.mxu0 0.0
        %1373 = vmatprep.subr.mxu0 0.0
        %1374 = vmatpush2.msra.mxu0 0.0
        %1375 = vmatprep.mubr.f32.mxu0 0.0
        %1376 = vmatmul.mubr.f32.gmra.mxu0 %v1282
        %v1377 = vpop.f32.mrf.mxu0
        %v1378 = vadd.f32 0.0, %v1377
        %v1379 = vpop.f32.mrf.mxu0
        %v1380 = vadd.f32 0.0, %v1379
        %1381 = vmatprep.mubr.f32.mxu0 0.0
        %1382 = vmatmul.mubr.f32.gmra.mxu0 %v1285
        %v1383 = vpop.f32.mrf.mxu0
        %v1384 = vadd.f32 0.0, %v1383
        %v1385 = vpop.f32.mrf.mxu0
        %v1386 = vadd.f32 0.0, %v1385
        %1387 = vmatprep.mubr.f32.mxu0 0.0
        %1388 = vmatmul.mubr.f32.gmra.mxu0 %v1288
        %v1389 = vpop.f32.mrf.mxu0
        %v1390 = vadd.f32 0.0, %v1389
        %v1391 = vpop.f32.mrf.mxu0
        %v1392 = vadd.f32 0.0, %v1391
        %1393 = vmatprep.mubr.f32.mxu0 0.0
        %1394 = vmatmul.mubr.f32.gmra.mxu0 %v1291
        %v1395 = vpop.f32.mrf.mxu0
        %v1396 = vadd.f32 0.0, %v1395
        %v1397 = vpop.f32.mrf.mxu0
        %v1398 = vadd.f32 0.0, %v1397
        %1399 = vmatprep.mubr.f32.mxu0 0.0
        %1400 = vmatmul.mubr.f32.gmra.mxu0 %v1294
        %v1401 = vpop.f32.mrf.mxu0
        %v1402 = vadd.f32 0.0, %v1401
        %v1403 = vpop.f32.mrf.mxu0
        %v1404 = vadd.f32 0.0, %v1403
        %1405 = vmatprep.mubr.f32.mxu0 0.0
        %1406 = vmatmul.mubr.f32.gmra.mxu0 %v1297
        %v1407 = vpop.f32.mrf.mxu0
        %v1408 = vadd.f32 0.0, %v1407
        %v1409 = vpop.f32.mrf.mxu0
        %v1410 = vadd.f32 0.0, %v1409
        %1411 = vmatprep.mubr.f32.mxu0 0.0
        %1412 = vmatmul.mubr.f32.gmra.mxu0 %v1300
        %v1413 = vpop.f32.mrf.mxu0
        %v1414 = vadd.f32 0.0, %v1413
        %v1415 = vpop.f32.mrf.mxu0
        %v1416 = vadd.f32 0.0, %v1415
        %1417 = vmatprep.mubr.f32.mxu0 0.0
        %1418 = vmatmul.mubr.f32.gmra.mxu0 %v1303
        %v1419 = vpop.f32.mrf.mxu0
        %v1420 = vadd.f32 0.0, %v1419
        %v1421 = vpop.f32.mrf.mxu0
        %v1422 = vadd.f32 0.0, %v1421
        %1423 = vdwg.mxu0
        %v1424 = vadd.f32 %v1249, %v1378
        %v1425 = vadd.f32 %v1250, %v1380
        %v1426 = vadd.f32 %v1251, %v1384
        %v1427 = vadd.f32 %v1252, %v1386
        %v1428 = vadd.f32 %v1253, %v1390
        %v1429 = vadd.f32 %v1254, %v1392
        %v1430 = vadd.f32 %v1255, %v1396
        %v1431 = vadd.f32 %v1256, %v1398
        %v1432 = vadd.f32 %v1257, %v1402
        %v1433 = vadd.f32 %v1258, %v1404
        %v1434 = vadd.f32 %v1259, %v1408
        %v1435 = vadd.f32 %v1260, %v1410
        %v1436 = vadd.f32 %v1261, %v1414
        %v1437 = vadd.f32 %v1262, %v1416
        %v1438 = vadd.f32 %v1263, %v1420
        %v1439 = vadd.f32 %v1264, %v1422
        %1440 = vrot.lane.b32.xlu0 %v217, 95
        %v1441 = vpop.permute.xlu0 %1440
        %1442 = vrot.lane.b32.xlu0 %v227, 95
        %v1443 = vpop.permute.xlu0 %1442
        %vm1444 = vcmp.lt.s32.totalorder %v393, 95
        %v1445 = vsel %vm1444, %v1441, %v1443
        %v1446 = vsel %vm1444, %v1443, %v1441
        %s1447 = scalar_lea.vmem %s1, 448
        %v1448 = vld [vmem:[%s1447] sm:$0xff]
        %v1449 = vld [vmem:[%s1447 + $0x8] sm:$0xff]
        %v1450 = vld [vmem:[%s1447 + $0x10] sm:$0xff]
        %v1451 = vld [vmem:[%s1447 + $0x18] sm:$0xff]
        %v1452 = vld [vmem:[%s1447 + $0x20] sm:$0xff]
        %v1453 = vld [vmem:[%s1447 + $0x28] sm:$0xff]
        %v1454 = vld [vmem:[%s1447 + $0x30] sm:$0xff]
        %v1455 = vld [vmem:[%s1447 + $0x38] sm:$0xff]
        %v1457 = vsel %vm228, %v1448, 0
        %v1460 = vsel %vm228, %v1449, 0
        %v1463 = vsel %vm228, %v1450, 0
        %v1466 = vsel %vm228, %v1451, 0
        %v1469 = vsel %vm228, %v1452, 0
        %v1472 = vsel %vm228, %v1453, 0
        %v1475 = vsel %vm228, %v1454, 0
        %v1478 = vsel %vm228, %v1455, 0
        %v1481 = vsel %vm253, %v1445, 0
        %v1484 = vsel %vm253, %v1446, 0
        %1486 = vmatprep.subr.mxu0 0.0
        %1487 = vmatpush1.msra.mxu0 0.0
        %1488 = vmatprep.subr.mxu0 0.0
        %1489 = vmatpush1.msra.mxu0 0.0
        %1490 = vmatprep.subr.mxu0 0.0
        %1491 = vmatpush1.msra.mxu0 0.0
        %1492 = vmatprep.subr.mxu0 0.0
        %1493 = vmatpush1.msra.mxu0 0.0
        %1494 = vmatprep.subr.mxu0 0.0
        %1495 = vmatpush1.msra.mxu0 0.0
        %1496 = vmatprep.subr.mxu0 0.0
        %1497 = vmatpush1.msra.mxu0 0.0
        %1498 = vmatprep.subr.mxu0 0.0
        %1499 = vmatpush1.msra.mxu0 0.0
        %1500 = vmatprep.subr.mxu0 0.0
        %1501 = vmatpush1.msra.mxu0 0.0
        %1502 = vmatprep.subr.mxu0 0.0
        %1503 = vmatpush1.msra.mxu0 0.0
        %1504 = vmatprep.subr.mxu0 0.0
        %1505 = vmatpush1.msra.mxu0 0.0
        %1506 = vmatprep.subr.mxu0 0.0
        %1507 = vmatpush1.msra.mxu0 0.0
        %1508 = vmatprep.subr.mxu0 0.0
        %1509 = vmatpush1.msra.mxu0 0.0
        %1510 = vmatprep.subr.mxu0 0.0
        %1511 = vmatpush1.msra.mxu0 0.0
        %1512 = vmatprep.subr.mxu0 0.0
        %1513 = vmatpush1.msra.mxu0 0.0
        %1514 = vmatprep.subr.mxu0 0.0
        %1515 = vmatpush1.msra.mxu0 0.0
        %1516 = vmatprep.subr.mxu0 %v1484
        %1517 = vmatpush1.msra.mxu0 %v1481
        %1518 = vmatprep.subr.mxu0 0.0
        %1519 = vmatpush2.msra.mxu0 0.0
        %1520 = vmatprep.subr.mxu0 0.0
        %1521 = vmatpush2.msra.mxu0 0.0
        %1522 = vmatprep.subr.mxu0 0.0
        %1523 = vmatpush2.msra.mxu0 0.0
        %1524 = vmatprep.subr.mxu0 0.0
        %1525 = vmatpush2.msra.mxu0 0.0
        %1526 = vmatprep.subr.mxu0 0.0
        %1527 = vmatpush2.msra.mxu0 0.0
        %1528 = vmatprep.subr.mxu0 0.0
        %1529 = vmatpush2.msra.mxu0 0.0
        %1530 = vmatprep.subr.mxu0 0.0
        %1531 = vmatpush2.msra.mxu0 0.0
        %1532 = vmatprep.subr.mxu0 0.0
        %1533 = vmatpush2.msra.mxu0 0.0
        %1534 = vmatprep.subr.mxu0 0.0
        %1535 = vmatpush2.msra.mxu0 0.0
        %1536 = vmatprep.subr.mxu0 0.0
        %1537 = vmatpush2.msra.mxu0 0.0
        %1538 = vmatprep.subr.mxu0 0.0
        %1539 = vmatpush2.msra.mxu0 0.0
        %1540 = vmatprep.subr.mxu0 0.0
        %1541 = vmatpush2.msra.mxu0 0.0
        %1542 = vmatprep.subr.mxu0 0.0
        %1543 = vmatpush2.msra.mxu0 0.0
        %1544 = vmatprep.subr.mxu0 0.0
        %1545 = vmatpush2.msra.mxu0 0.0
        %1546 = vmatprep.subr.mxu0 0.0
        %1547 = vmatpush2.msra.mxu0 0.0
        %1548 = vmatprep.subr.mxu0 0.0
        %1549 = vmatpush2.msra.mxu0 0.0
        %1550 = vmatprep.mubr.f32.mxu0 0.0
        %1551 = vmatmul.mubr.f32.gmra.mxu0 %v1457
        %v1552 = vpop.f32.mrf.mxu0
        %v1553 = vadd.f32 0.0, %v1552
        %v1554 = vpop.f32.mrf.mxu0
        %v1555 = vadd.f32 0.0, %v1554
        %1556 = vmatprep.mubr.f32.mxu0 0.0
        %1557 = vmatmul.mubr.f32.gmra.mxu0 %v1460
        %v1558 = vpop.f32.mrf.mxu0
        %v1559 = vadd.f32 0.0, %v1558
        %v1560 = vpop.f32.mrf.mxu0
        %v1561 = vadd.f32 0.0, %v1560
        %1562 = vmatprep.mubr.f32.mxu0 0.0
        %1563 = vmatmul.mubr.f32.gmra.mxu0 %v1463
        %v1564 = vpop.f32.mrf.mxu0
        %v1565 = vadd.f32 0.0, %v1564
        %v1566 = vpop.f32.mrf.mxu0
        %v1567 = vadd.f32 0.0, %v1566
        %1568 = vmatprep.mubr.f32.mxu0 0.0
        %1569 = vmatmul.mubr.f32.gmra.mxu0 %v1466
        %v1570 = vpop.f32.mrf.mxu0
        %v1571 = vadd.f32 0.0, %v1570
        %v1572 = vpop.f32.mrf.mxu0
        %v1573 = vadd.f32 0.0, %v1572
        %1574 = vmatprep.mubr.f32.mxu0 0.0
        %1575 = vmatmul.mubr.f32.gmra.mxu0 %v1469
        %v1576 = vpop.f32.mrf.mxu0
        %v1577 = vadd.f32 0.0, %v1576
        %v1578 = vpop.f32.mrf.mxu0
        %v1579 = vadd.f32 0.0, %v1578
        %1580 = vmatprep.mubr.f32.mxu0 0.0
        %1581 = vmatmul.mubr.f32.gmra.mxu0 %v1472
        %v1582 = vpop.f32.mrf.mxu0
        %v1583 = vadd.f32 0.0, %v1582
        %v1584 = vpop.f32.mrf.mxu0
        %v1585 = vadd.f32 0.0, %v1584
        %1586 = vmatprep.mubr.f32.mxu0 0.0
        %1587 = vmatmul.mubr.f32.gmra.mxu0 %v1475
        %v1588 = vpop.f32.mrf.mxu0
        %v1589 = vadd.f32 0.0, %v1588
        %v1590 = vpop.f32.mrf.mxu0
        %v1591 = vadd.f32 0.0, %v1590
        %1592 = vmatprep.mubr.f32.mxu0 0.0
        %1593 = vmatmul.mubr.f32.gmra.mxu0 %v1478
        %v1594 = vpop.f32.mrf.mxu0
        %v1595 = vadd.f32 0.0, %v1594
        %v1596 = vpop.f32.mrf.mxu0
        %v1597 = vadd.f32 0.0, %v1596
        %1598 = vdwg.mxu0
        %v1599 = vadd.f32 %v1424, %v1553
        %v1600 = vadd.f32 %v1425, %v1555
        %v1601 = vadd.f32 %v1426, %v1559
        %v1602 = vadd.f32 %v1427, %v1561
        %v1603 = vadd.f32 %v1428, %v1565
        %v1604 = vadd.f32 %v1429, %v1567
        %v1605 = vadd.f32 %v1430, %v1571
        %v1606 = vadd.f32 %v1431, %v1573
        %v1607 = vadd.f32 %v1432, %v1577
        %v1608 = vadd.f32 %v1433, %v1579
        %v1609 = vadd.f32 %v1434, %v1583
        %v1610 = vadd.f32 %v1435, %v1585
        %v1611 = vadd.f32 %v1436, %v1589
        %v1612 = vadd.f32 %v1437, %v1591
        %v1613 = vadd.f32 %v1438, %v1595
        %v1614 = vadd.f32 %v1439, %v1597
        %1615 = vrot.lane.b32.xlu0 %v217, 94
        %v1616 = vpop.permute.xlu0 %1615
        %1617 = vrot.lane.b32.xlu0 %v227, 94
        %v1618 = vpop.permute.xlu0 %1617
        %vm1619 = vcmp.lt.s32.totalorder %v393, 94
        %v1620 = vsel %vm1619, %v1616, %v1618
        %v1621 = vsel %vm1619, %v1618, %v1616
        %s1622 = scalar_lea.vmem %s1, 512
        %v1623 = vld [vmem:[%s1622] sm:$0xff]
        %v1624 = vld [vmem:[%s1622 + $0x8] sm:$0xff]
        %v1625 = vld [vmem:[%s1622 + $0x10] sm:$0xff]
        %v1626 = vld [vmem:[%s1622 + $0x18] sm:$0xff]
        %v1627 = vld [vmem:[%s1622 + $0x20] sm:$0xff]
        %v1628 = vld [vmem:[%s1622 + $0x28] sm:$0xff]
        %v1629 = vld [vmem:[%s1622 + $0x30] sm:$0xff]
        %v1630 = vld [vmem:[%s1622 + $0x38] sm:$0xff]
        %v1632 = vsel %vm228, %v1623, 0
        %v1635 = vsel %vm228, %v1624, 0
        %v1638 = vsel %vm228, %v1625, 0
        %v1641 = vsel %vm228, %v1626, 0
        %v1644 = vsel %vm228, %v1627, 0
        %v1647 = vsel %vm228, %v1628, 0
        %v1650 = vsel %vm228, %v1629, 0
        %v1653 = vsel %vm228, %v1630, 0
        %v1656 = vsel %vm253, %v1620, 0
        %v1659 = vsel %vm253, %v1621, 0
        %1661 = vmatprep.subr.mxu0 0.0
        %1662 = vmatpush1.msra.mxu0 0.0
        %1663 = vmatprep.subr.mxu0 0.0
        %1664 = vmatpush1.msra.mxu0 0.0
        %1665 = vmatprep.subr.mxu0 0.0
        %1666 = vmatpush1.msra.mxu0 0.0
        %1667 = vmatprep.subr.mxu0 0.0
        %1668 = vmatpush1.msra.mxu0 0.0
        %1669 = vmatprep.subr.mxu0 0.0
        %1670 = vmatpush1.msra.mxu0 0.0
        %1671 = vmatprep.subr.mxu0 0.0
        %1672 = vmatpush1.msra.mxu0 0.0
        %1673 = vmatprep.subr.mxu0 0.0
        %1674 = vmatpush1.msra.mxu0 0.0
        %1675 = vmatprep.subr.mxu0 0.0
        %1676 = vmatpush1.msra.mxu0 0.0
        %1677 = vmatprep.subr.mxu0 0.0
        %1678 = vmatpush1.msra.mxu0 0.0
        %1679 = vmatprep.subr.mxu0 0.0
        %1680 = vmatpush1.msra.mxu0 0.0
        %1681 = vmatprep.subr.mxu0 0.0
        %1682 = vmatpush1.msra.mxu0 0.0
        %1683 = vmatprep.subr.mxu0 0.0
        %1684 = vmatpush1.msra.mxu0 0.0
        %1685 = vmatprep.subr.mxu0 0.0
        %1686 = vmatpush1.msra.mxu0 0.0
        %1687 = vmatprep.subr.mxu0 0.0
        %1688 = vmatpush1.msra.mxu0 0.0
        %1689 = vmatprep.subr.mxu0 0.0
        %1690 = vmatpush1.msra.mxu0 0.0
        %1691 = vmatprep.subr.mxu0 %v1659
        %1692 = vmatpush1.msra.mxu0 %v1656
        %1693 = vmatprep.subr.mxu0 0.0
        %1694 = vmatpush2.msra.mxu0 0.0
        %1695 = vmatprep.subr.mxu0 0.0
        %1696 = vmatpush2.msra.mxu0 0.0
        %1697 = vmatprep.subr.mxu0 0.0
        %1698 = vmatpush2.msra.mxu0 0.0
        %1699 = vmatprep.subr.mxu0 0.0
        %1700 = vmatpush2.msra.mxu0 0.0
        %1701 = vmatprep.subr.mxu0 0.0
        %1702 = vmatpush2.msra.mxu0 0.0
        %1703 = vmatprep.subr.mxu0 0.0
        %1704 = vmatpush2.msra.mxu0 0.0
        %1705 = vmatprep.subr.mxu0 0.0
        %1706 = vmatpush2.msra.mxu0 0.0
        %1707 = vmatprep.subr.mxu0 0.0
        %1708 = vmatpush2.msra.mxu0 0.0
        %1709 = vmatprep.subr.mxu0 0.0
        %1710 = vmatpush2.msra.mxu0 0.0
        %1711 = vmatprep.subr.mxu0 0.0
        %1712 = vmatpush2.msra.mxu0 0.0
        %1713 = vmatprep.subr.mxu0 0.0
        %1714 = vmatpush2.msra.mxu0 0.0
        %1715 = vmatprep.subr.mxu0 0.0
        %1716 = vmatpush2.msra.mxu0 0.0
        %1717 = vmatprep.subr.mxu0 0.0
        %1718 = vmatpush2.msra.mxu0 0.0
        %1719 = vmatprep.subr.mxu0 0.0
        %1720 = vmatpush2.msra.mxu0 0.0
        %1721 = vmatprep.subr.mxu0 0.0
        %1722 = vmatpush2.msra.mxu0 0.0
        %1723 = vmatprep.subr.mxu0 0.0
        %1724 = vmatpush2.msra.mxu0 0.0
        %1725 = vmatprep.mubr.f32.mxu0 0.0
        %1726 = vmatmul.mubr.f32.gmra.mxu0 %v1632
        %v1727 = vpop.f32.mrf.mxu0
        %v1728 = vadd.f32 0.0, %v1727
        %v1729 = vpop.f32.mrf.mxu0
        %v1730 = vadd.f32 0.0, %v1729
        %1731 = vmatprep.mubr.f32.mxu0 0.0
        %1732 = vmatmul.mubr.f32.gmra.mxu0 %v1635
        %v1733 = vpop.f32.mrf.mxu0
        %v1734 = vadd.f32 0.0, %v1733
        %v1735 = vpop.f32.mrf.mxu0
        %v1736 = vadd.f32 0.0, %v1735
        %1737 = vmatprep.mubr.f32.mxu0 0.0
        %1738 = vmatmul.mubr.f32.gmra.mxu0 %v1638
        %v1739 = vpop.f32.mrf.mxu0
        %v1740 = vadd.f32 0.0, %v1739
        %v1741 = vpop.f32.mrf.mxu0
        %v1742 = vadd.f32 0.0, %v1741
        %1743 = vmatprep.mubr.f32.mxu0 0.0
        %1744 = vmatmul.mubr.f32.gmra.mxu0 %v1641
        %v1745 = vpop.f32.mrf.mxu0
        %v1746 = vadd.f32 0.0, %v1745
        %v1747 = vpop.f32.mrf.mxu0
        %v1748 = vadd.f32 0.0, %v1747
        %1749 = vmatprep.mubr.f32.mxu0 0.0
        %1750 = vmatmul.mubr.f32.gmra.mxu0 %v1644
        %v1751 = vpop.f32.mrf.mxu0
        %v1752 = vadd.f32 0.0, %v1751
        %v1753 = vpop.f32.mrf.mxu0
        %v1754 = vadd.f32 0.0, %v1753
        %1755 = vmatprep.mubr.f32.mxu0 0.0
        %1756 = vmatmul.mubr.f32.gmra.mxu0 %v1647
        %v1757 = vpop.f32.mrf.mxu0
        %v1758 = vadd.f32 0.0, %v1757
        %v1759 = vpop.f32.mrf.mxu0
        %v1760 = vadd.f32 0.0, %v1759
        %1761 = vmatprep.mubr.f32.mxu0 0.0
        %1762 = vmatmul.mubr.f32.gmra.mxu0 %v1650
        %v1763 = vpop.f32.mrf.mxu0
        %v1764 = vadd.f32 0.0, %v1763
        %v1765 = vpop.f32.mrf.mxu0
        %v1766 = vadd.f32 0.0, %v1765
        %1767 = vmatprep.mubr.f32.mxu0 0.0
        %1768 = vmatmul.mubr.f32.gmra.mxu0 %v1653
        %v1769 = vpop.f32.mrf.mxu0
        %v1770 = vadd.f32 0.0, %v1769
        %v1771 = vpop.f32.mrf.mxu0
        %v1772 = vadd.f32 0.0, %v1771
        %1773 = vdwg.mxu0
        %v1774 = vadd.f32 %v1599, %v1728
        %v1775 = vadd.f32 %v1600, %v1730
        %v1776 = vadd.f32 %v1601, %v1734
        %v1777 = vadd.f32 %v1602, %v1736
        %v1778 = vadd.f32 %v1603, %v1740
        %v1779 = vadd.f32 %v1604, %v1742
        %v1780 = vadd.f32 %v1605, %v1746
        %v1781 = vadd.f32 %v1606, %v1748
        %v1782 = vadd.f32 %v1607, %v1752
        %v1783 = vadd.f32 %v1608, %v1754
        %v1784 = vadd.f32 %v1609, %v1758
        %v1785 = vadd.f32 %v1610, %v1760
        %v1786 = vadd.f32 %v1611, %v1764
        %v1787 = vadd.f32 %v1612, %v1766
        %v1788 = vadd.f32 %v1613, %v1770
        %v1789 = vadd.f32 %v1614, %v1772
        %1790 = vst [vmem:[%s163] sm:$0xff] %v1774
        %1791 = vst [vmem:[%s163 + $0x8] sm:$0xff] %v1775
        %1792 = vst [vmem:[%s163 + $0x10] sm:$0xff] %v1776
        %1793 = vst [vmem:[%s163 + $0x18] sm:$0xff] %v1777
        %1794 = vst [vmem:[%s163 + $0x20] sm:$0xff] %v1778
        %1795 = vst [vmem:[%s163 + $0x28] sm:$0xff] %v1779
        %1796 = vst [vmem:[%s163 + $0x30] sm:$0xff] %v1780
        %1797 = vst [vmem:[%s163 + $0x38] sm:$0xff] %v1781
        %1798 = vst [vmem:[%s163 + $0x40] sm:$0xff] %v1782
        %1799 = vst [vmem:[%s163 + $0x48] sm:$0xff] %v1783
        %1800 = vst [vmem:[%s163 + $0x50] sm:$0xff] %v1784
        %1801 = vst [vmem:[%s163 + $0x58] sm:$0xff] %v1785
        %1802 = vst [vmem:[%s163 + $0x60] sm:$0xff] %v1786
        %1803 = vst [vmem:[%s163 + $0x68] sm:$0xff] %v1787
        %1804 = vst [vmem:[%s163 + $0x70] sm:$0xff] %v1788
        %1805 = vst [vmem:[%s163 + $0x78] sm:$0xff] %v1789
        %s1806 = sand.u32 %s93, 1
        %s1807 = scalar_lea.sflag [#allocation3], %s1806
        %s1808 = sand.u32 %s93, 1
        %s1809 = smul.addr %s1808, 128
        %s1810 = scalar_lea.vmem [#allocation2], %s1809
        // Predicated region
        $region33: #{tpu_custom_call.1} parent=31 // pred_check
          %p1811 = pneg %p103
        $region34: #{tpu_custom_call.1} parent=31 // pred_check_branch
          %1813 = sbr.rel (%p1811) target = $region36
        $region35: #{tpu_custom_call.1} parent=31 // pred_region
          %s1815 = ssub.s32 2048, 2048
          %1816 = vsyncadd %s1807, %s1815
          %s1817 = smul.addr %s17, 16
          %s1818 = smul.addr %s1817, 128
          %s1819 = scalar_lea.hbm %s3, %s1818
          %s1820 = sshll.u32 %s1810, 4
          %s1821 = int_to_ptr.vmem [resolvable:$true] %s1820
          %1826 = dma.vmem_to_hbm [thread:$0]  %s1821, 2048, %s1819, %s1807, 256, 256, 16
        $region36: #{tpu_custom_call.1} parent=31 // pred_fallthru
          _
      $region32: #{tpu_custom_call.1} parent=5 // pred_fallthru
        _
      %p1827 = scmp.le.s32.totalorder 2, %s12
      // Predicated region
      $region37: #{tpu_custom_call.1} parent=5 // pred_check
        %p1828 = pneg %p1827
      $region38: #{tpu_custom_call.1} parent=5 // pred_check_branch
        %1830 = sbr.rel (%p1828) target = $region40
      $region39: #{tpu_custom_call.1} parent=5 // pred_region
        %s1831 = ssub.s32 %s12, 2
        // Predicated region
        $region41: #{tpu_custom_call.1} parent=39 // pred_check
          %p1832 = pneg %p109
        $region42: #{tpu_custom_call.1} parent=39 // pred_check_branch
          %1834 = sbr.rel (%p1832) target = $region44
        $region43: #{tpu_custom_call.1} parent=39 // pred_region
          %s1835 = sand.u32 %s94, 1
          %s1836 = scalar_lea.sflag [#allocation3], %s1835
          %s1837 = sand.u32 %s94, 1
          %s1838 = smul.addr %s1837, 128
          %s1839 = scalar_lea.vmem [#allocation2], %s1838
          %1840 = dma.done %s1836, 2048
        $region44: #{tpu_custom_call.1} parent=39 // pred_fallthru
          _
      $region40: #{tpu_custom_call.1} parent=5 // pred_fallthru
        _
    $region6: #{tpu_custom_call.1} parent=1 // loop_footer
      %s16 = sadd.s32 1, %s12
    $region7: #{tpu_custom_call.1} parent=1 // loop_footer_branch
      %11 = sbr.rel target = $region3
    $region8: #{tpu_custom_call.1} parent=1 // loop_exit
      _
    %1841 = vsyncpa [#allocation3], 1
    %s1842 = scalar_lea.sflag [#allocation3], 1
    %1843 = vsyncpa %s1842, 1

</llo_original>
